<compile_context>
chip_gen: v6e
topology: v6e:2x2x1
jax: 0.10.0
libtpu: 0.0.40
codegen_flags: <defaults>
</compile_context>

<pallas_src>
import jax
import jax.numpy as jnp
from jax.experimental import pallas as pl
from jax.experimental.pallas import tpu as pltpu


# ------------------------------ Fused model kernel ------------------------------

def fused_lstm_kernel(gx_ref, sid_ref, whh_ref, emb_ref, w1_ref, w2_ref, blin_ref,
                      out_ref):
    T, B, H4 = gx_ref.shape
    H = H4 // 4
    NE = emb_ref.shape[0]
    f32 = jnp.float32
    bf16 = jnp.bfloat16

    # ---- (1) Independent prologue: seed the output accumulator with the embedding
    # contribution + bias so there is no epilogue after the last dependent step.
    ids = sid_ref[...]                                                     # (B, 1) int32
    onehot = (jax.lax.broadcasted_iota(jnp.int32, (B, NE), 1) == ids).astype(bf16)
    emb = jnp.dot(onehot, emb_ref[...], preferred_element_type=f32)        # (B, E)
    out_acc = (jnp.dot(emb.astype(bf16), w2_ref[...], preferred_element_type=f32)
               + blin_ref[...])                                            # (B, O_pad) f32

    # ---- (2) Recurrence, fully unrolled; final linear folded into each step ----
    whh = whh_ref[...]                                                     # (H, 4H) bf16
    h = jnp.zeros((B, H), f32)
    c = jnp.zeros((B, H), f32)
    for t in range(T):                      # T is small & static -> full unroll
        # gx_ref[t] is a static first-axis index: one contiguous (B, 4H) sublane slab.
        gates = gx_ref[t] + jnp.dot(h.astype(bf16), whh,
                                    preferred_element_type=f32)            # (B, 4H) f32
        # H = 128 -> each gate slice is a whole 128-lane slab (PyTorch order i,f,g,o).
        i_g = jax.nn.sigmoid(gates[:, 0 * H:1 * H])
        f_g = jax.nn.sigmoid(gates[:, 1 * H:2 * H])
        g_g = jnp.tanh(gates[:, 2 * H:3 * H])
        o_g = jax.nn.sigmoid(gates[:, 3 * H:4 * H])
        c = f_g * c + i_g * g_g
        h = o_g * jnp.tanh(c)
        # Fold the final linear in: static, 128-row-aligned ref slice of W_lin^T.
        out_acc = out_acc + jnp.dot(h.astype(bf16), w1_ref[t * H:(t + 1) * H, :],
                                    preferred_element_type=f32)

    out_ref[...] = out_acc.astype(out_ref.dtype)


# --------------------------------- Wrapper ---------------------------------

def model_forward(params, input_seq, stock_id):
    """input_seq: (B, T, I) float32 ; stock_id: (B,) int32 -> (B, output_size)."""
    B, T, I = input_seq.shape
    H4 = params["w_ih"].shape[0]
    H = H4 // 4
    NE, E = params["embedding"].shape
    O, D = params["w_lin"].shape
    assert D == T * H + E

    LANES, SUBLANES = 128, 8
    O_pad = ((O + LANES - 1) // LANES) * LANES
    B_pad = ((B + SUBLANES - 1) // SUBLANES) * SUBLANES
    f32, bf16 = jnp.float32, jnp.bfloat16

    # Pad batch to a full sublane group -> unmasked stores, full-sublane gate math.
    x_pad = jnp.pad(input_seq, ((0, B_pad - B), (0, 0), (0, 0)))
    sid = jnp.pad(stock_id.astype(jnp.int32), (0, B_pad - B)).reshape(B_pad, 1)

    # Hoisted input projection (+ both biases) for ALL timesteps, time-major so the
    # kernel reads one contiguous (B_pad, 4H) slab per step.  Tiny; done once in XLA
    # to keep the degenerate K=I matmul and the reshape off the kernel prologue.
    x_tm = jnp.transpose(x_pad, (1, 0, 2))                                  # (T, B_pad, I)
    bias = (params["b_ih"] + params["b_hh"]).astype(f32)
    gx = jnp.einsum("tbi,ih->tbh", x_tm.astype(f32),
                    params["w_ih"].T.astype(f32)) + bias                    # (T, B_pad, 4H)

    # bf16 weights for the in-kernel MXU dots (state / gate math stays f32).
    whh_t = params["w_hh"].T.astype(bf16)                                   # (H, 4H)
    emb_tbl = params["embedding"].astype(bf16)                              # (NE, E)
    wlin_t = params["w_lin"].T                                              # (D, O)
    pad_o = ((0, 0), (0, O_pad - O))
    w1 = jnp.pad(wlin_t[:T * H, :], pad_o).astype(bf16)                     # (T*H, O_pad)
    w2 = jnp.pad(wlin_t[T * H:, :], pad_o).astype(bf16)                     # (E,   O_pad)
    b_lin = jnp.pad(params["b_lin"], (0, O_pad - O)).reshape(1, O_pad).astype(f32)

    out_pad = pl.pallas_call(
        fused_lstm_kernel,
        out_shape=jax.ShapeDtypeStruct((B_pad, O_pad), input_seq.dtype),
        grid_spec=pltpu.PrefetchScalarGridSpec(
            num_scalar_prefetch=0,
            # Whole problem in one program.  (v7x: only tile batch across the 2 TCs
            # once per-core B >= 8; then single-buffer the weight specs and budget
            # vmem_limit_bytes for 64 MiB VMEM.)
            grid=(1,),
            in_specs=[
                pl.BlockSpec((T, B_pad, H4), lambda b: (0, 0, 0)),   # gx (time-major)
                pl.BlockSpec((B_pad, 1), lambda b: (b, 0)),          # stock ids
                pl.BlockSpec((H, H4), lambda b: (0, 0)),             # W_hh^T (bf16)
                pl.BlockSpec((NE, E), lambda b: (0, 0)),             # embedding table (bf16)
                pl.BlockSpec((T * H, O_pad), lambda b: (0, 0)),      # W_lin^T lstm rows (bf16)
                pl.BlockSpec((E, O_pad), lambda b: (0, 0)),          # W_lin^T emb rows (bf16)
                pl.BlockSpec((1, O_pad), lambda b: (0, 0)),          # b_lin (f32)
            ],
            out_specs=pl.BlockSpec((B_pad, O_pad), lambda b: (b, 0)),
        ),
        compiler_params=pltpu.CompilerParams(
            dimension_semantics=("parallel",)),                      # batch is independent
    )(gx, sid, whh_t, emb_tbl, w1, w2, b_lin)

    return out_pad[:B, :O]


# ------------------------------ Params / reference ------------------------------

def init_params(key, sequence_length, input_size, output_size,
                num_embeddings, embedding_dim, hidden_layer_size):
    ks = jax.random.split(key, 7)
    H = hidden_layer_size
    scale = 1.0 / jnp.sqrt(H)
    D = H * sequence_length + embedding_dim
    return {
        "w_ih": jax.random.uniform(ks[0], (4 * H, input_size), jnp.float32, -scale, scale),
        "w_hh": jax.random.uniform(ks[1], (4 * H, H), jnp.float32, -scale, scale),
        "b_ih": jax.random.uniform(ks[2], (4 * H,), jnp.float32, -scale, scale),
        "b_hh": jax.random.uniform(ks[3], (4 * H,), jnp.float32, -scale, scale),
        "embedding": jax.random.normal(ks[4], (num_embeddings, embedding_dim), jnp.float32),
        "w_lin": jax.random.uniform(ks[5], (output_size, D), jnp.float32,
                                    -1.0 / jnp.sqrt(D), 1.0 / jnp.sqrt(D)),
        "b_lin": jax.random.uniform(ks[6], (output_size,), jnp.float32,
                                    -1.0 / jnp.sqrt(D), 1.0 / jnp.sqrt(D)),
    }


def reference_forward(params, input_seq, stock_id):
    """Pure-JAX reference matching PyTorch nn.LSTM + Embedding + Linear semantics."""
    B, T, I = input_seq.shape
    H = params["w_hh"].shape[1]
    x = jnp.transpose(input_seq, (1, 0, 2))                    # (T, B, I)

    def step(carry, x_t):
        h, c = carry
        gates = (x_t @ params["w_ih"].T + h @ params["w_hh"].T
                 + params["b_ih"] + params["b_hh"])
        i = jax.nn.sigmoid(gates[:, 0 * H:1 * H])
        f = jax.nn.sigmoid(gates[:, 1 * H:2 * H])
        g = jnp.tanh(gates[:, 2 * H:3 * H])
        o = jax.nn.sigmoid(gates[:, 3 * H:4 * H])
        c = f * c + i * g
        h = o * jnp.tanh(c)
        return (h, c), h

    init = (jnp.zeros((B, H), jnp.float32), jnp.zeros((B, H), jnp.float32))
    _, hs = jax.lax.scan(step, init, x)                        # (T, B, H)
    lstm_flat = jnp.transpose(hs, (1, 0, 2)).reshape(B, T * H)
    emb = params["embedding"][stock_id]
    feats = jnp.concatenate([lstm_flat, emb], axis=-1)
    return feats @ params["w_lin"].T + params["b_lin"]


# ----------------------------------- Main -----------------------------------

if __name__ == "__main__":
    sequence_length = 8
    input_size = 4
    output_size = 5
    num_embeddings = 10
    embedding_dim = 8
    batch_size = 2
    hidden_layer_size = 128   # module default; keeps gate slices & h tiles 128-lane aligned

    key = jax.random.PRNGKey(0)
    k_param, k_x, k_id = jax.random.split(key, 3)

    params = init_params(k_param, sequence_length, input_size, output_size,
                         num_embeddings, embedding_dim, hidden_layer_size)

    input_seq = jax.random.normal(k_x, (batch_size, sequence_length, input_size),
                                  jnp.float32)
    stock_id = jax.random.randint(k_id, (batch_size,), 0, num_embeddings, jnp.int32)

    fwd = jax.jit(model_forward)
    out = fwd(params, input_seq, stock_id)
    jax.block_until_ready(out)
    assert out.shape == (batch_size, output_size), out.shape

    ref = reference_forward(params, input_seq, stock_id)
    assert jnp.allclose(out, ref, rtol=2e-2, atol=2e-2), (out, ref)

    print("KERNEL_OK")
</pallas_src>

<mosaic_0001>
module attributes {stable_mosaic.version = 11 : i64} {
  func.func @fused_lstm_kernel(%arg0: i32, %arg1: memref<8x8x512xf32, #tpu.memory_space<vmem>>, %arg2: memref<8x1xi32, #tpu.memory_space<vmem>>, %arg3: memref<128x512xbf16, #tpu.memory_space<vmem>>, %arg4: memref<10x8xbf16, #tpu.memory_space<vmem>>, %arg5: memref<1024x128xbf16, #tpu.memory_space<vmem>>, %arg6: memref<8x128xbf16, #tpu.memory_space<vmem>>, %arg7: memref<1x128xf32, #tpu.memory_space<vmem>>, %arg8: memref<8x128xf32, #tpu.memory_space<vmem>>) attributes {dimension_semantics = [#tpu.dimension_semantics<parallel>], iteration_bounds = array<i64: 1>, scalar_prefetch = 0 : i64, scratch_operands = 0 : i64, tpu.core_type = #tpu.core_type<tc>, window_params = [{pipeline_mode = #tpu.pipeline_mode<synchronous>, transform_indices = @transform_0, window_bounds = array<i64: 8, 8, 512>}, {transform_indices = @transform_1, window_bounds = array<i64: 8, 1>}, {pipeline_mode = #tpu.pipeline_mode<synchronous>, transform_indices = @transform_2, window_bounds = array<i64: 128, 512>}, {pipeline_mode = #tpu.pipeline_mode<synchronous>, transform_indices = @transform_3, window_bounds = array<i64: 10, 8>}, {pipeline_mode = #tpu.pipeline_mode<synchronous>, transform_indices = @transform_4, window_bounds = array<i64: 1024, 128>}, {pipeline_mode = #tpu.pipeline_mode<synchronous>, transform_indices = @transform_5, window_bounds = array<i64: 8, 128>}, {pipeline_mode = #tpu.pipeline_mode<synchronous>, transform_indices = @transform_6, window_bounds = array<i64: 1, 128>}, {transform_indices = @transform_7, window_bounds = array<i64: 8, 128>}]} {
    %c0 = arith.constant 0 : index
    %c0_0 = arith.constant 0 : index
    %0 = vector.load %arg2[%c0, %c0_0] : memref<8x1xi32, #tpu.memory_space<vmem>>, vector<8x1xi32>
    %1 = tpu.iota {dimensions = array<i32: 1>} : vector<8x10xi32>
    %2 = vector.broadcast %0 : vector<8x1xi32> to vector<8x10xi32>
    %3 = arith.cmpi eq, %1, %2 : vector<8x10xi32>
    %4 = arith.extui %3 : vector<8x10xi1> to vector<8x10xi32>
    %5 = arith.sitofp %4 : vector<8x10xi32> to vector<8x10xf32>
    %6 = arith.truncf %5 : vector<8x10xf32> to vector<8x10xbf16>
    %c0_1 = arith.constant 0 : index
    %c0_2 = arith.constant 0 : index
    %7 = vector.load %arg4[%c0_1, %c0_2] : memref<10x8xbf16, #tpu.memory_space<vmem>>, vector<10x8xbf16>
    %cst = arith.constant dense<0.000000e+00> : vector<8x8xf32>
    %8 = tpu.matmul %6, %7, %cst {dimension_numbers = #tpu.dot_dimension_numbers<[1], [0], [0], [1], [0, 0, 1, 1], [], []>} : vector<8x10xbf16>, vector<10x8xbf16>, vector<8x8xf32> -> vector<8x8xf32>
    %9 = arith.truncf %8 : vector<8x8xf32> to vector<8x8xbf16>
    %c0_3 = arith.constant 0 : index
    %c0_4 = arith.constant 0 : index
    %10 = vector.load %arg6[%c0_3, %c0_4] : memref<8x128xbf16, #tpu.memory_space<vmem>>, vector<8x128xbf16>
    %cst_5 = arith.constant dense<0.000000e+00> : vector<8x128xf32>
    %11 = tpu.matmul %9, %10, %cst_5 {dimension_numbers = #tpu.dot_dimension_numbers<[1], [0], [0], [1], [0, 0, 1, 1], [], []>} : vector<8x8xbf16>, vector<8x128xbf16>, vector<8x128xf32> -> vector<8x128xf32>
    %c0_6 = arith.constant 0 : index
    %c0_7 = arith.constant 0 : index
    %12 = vector.load %arg7[%c0_6, %c0_7] : memref<1x128xf32, #tpu.memory_space<vmem>>, vector<1x128xf32>
    %13 = vector.broadcast %12 : vector<1x128xf32> to vector<8x128xf32>
    %14 = arith.addf %11, %13 : vector<8x128xf32>
    %c0_8 = arith.constant 0 : index
    %c0_9 = arith.constant 0 : index
    %15 = vector.load %arg3[%c0_8, %c0_9] : memref<128x512xbf16, #tpu.memory_space<vmem>>, vector<128x512xbf16>
    %cst_10 = arith.constant 0.000000e+00 : f32
    %16 = vector.broadcast %cst_10 : f32 to vector<8x128xf32>
    %cst_11 = arith.constant 0.000000e+00 : f32
    %17 = vector.broadcast %cst_11 : f32 to vector<8x128xf32>
    %c0_12 = arith.constant 0 : index
    %c0_13 = arith.constant 0 : index
    %c0_14 = arith.constant 0 : index
    %18 = vector.load %arg1[%c0_12, %c0_13, %c0_14] : memref<8x8x512xf32, #tpu.memory_space<vmem>>, vector<1x8x512xf32>
    %19 = vector.shape_cast %18 : vector<1x8x512xf32> to vector<8x512xf32>
    %20 = arith.truncf %16 : vector<8x128xf32> to vector<8x128xbf16>
    %cst_15 = arith.constant dense<0.000000e+00> : vector<8x512xf32>
    %21 = tpu.matmul %20, %15, %cst_15 {dimension_numbers = #tpu.dot_dimension_numbers<[1], [0], [0], [1], [0, 0, 1, 1], [], []>} : vector<8x128xbf16>, vector<128x512xbf16>, vector<8x512xf32> -> vector<8x512xf32>
    %22 = arith.addf %19, %21 : vector<8x512xf32>
    %23 = vector.extract_strided_slice %22 {offsets = [0, 0], sizes = [8, 128], strides = [1, 1]} : vector<8x512xf32> to vector<8x128xf32>
    %24 = arith.negf %23 : vector<8x128xf32>
    %25 = math.exp %24 : vector<8x128xf32>
    %cst_16 = arith.constant 1.000000e+00 : f32
    %26 = vector.broadcast %cst_16 : f32 to vector<8x128xf32>
    %27 = arith.addf %26, %25 : vector<8x128xf32>
    %28 = arith.divf %26, %27 : vector<8x128xf32>
    %29 = vector.extract_strided_slice %22 {offsets = [0, 128], sizes = [8, 128], strides = [1, 1]} : vector<8x512xf32> to vector<8x128xf32>
    %30 = arith.negf %29 : vector<8x128xf32>
    %31 = math.exp %30 : vector<8x128xf32>
    %cst_17 = arith.constant 1.000000e+00 : f32
    %32 = vector.broadcast %cst_17 : f32 to vector<8x128xf32>
    %33 = arith.addf %32, %31 : vector<8x128xf32>
    %34 = arith.divf %32, %33 : vector<8x128xf32>
    %35 = vector.extract_strided_slice %22 {offsets = [0, 256], sizes = [8, 128], strides = [1, 1]} : vector<8x512xf32> to vector<8x128xf32>
    %36 = math.tanh %35 : vector<8x128xf32>
    %37 = vector.extract_strided_slice %22 {offsets = [0, 384], sizes = [8, 128], strides = [1, 1]} : vector<8x512xf32> to vector<8x128xf32>
    %38 = arith.negf %37 : vector<8x128xf32>
    %39 = math.exp %38 : vector<8x128xf32>
    %cst_18 = arith.constant 1.000000e+00 : f32
    %40 = vector.broadcast %cst_18 : f32 to vector<8x128xf32>
    %41 = arith.addf %40, %39 : vector<8x128xf32>
    %42 = arith.divf %40, %41 : vector<8x128xf32>
    %43 = arith.mulf %34, %17 : vector<8x128xf32>
    %44 = arith.mulf %28, %36 : vector<8x128xf32>
    %45 = arith.addf %43, %44 : vector<8x128xf32>
    %46 = math.tanh %45 : vector<8x128xf32>
    %47 = arith.mulf %42, %46 : vector<8x128xf32>
    %48 = arith.truncf %47 : vector<8x128xf32> to vector<8x128xbf16>
    %c0_19 = arith.constant 0 : index
    %c0_20 = arith.constant 0 : index
    %49 = vector.load %arg5[%c0_19, %c0_20] : memref<1024x128xbf16, #tpu.memory_space<vmem>>, vector<128x128xbf16>
    %cst_21 = arith.constant dense<0.000000e+00> : vector<8x128xf32>
    %50 = tpu.matmul %48, %49, %cst_21 {dimension_numbers = #tpu.dot_dimension_numbers<[1], [0], [0], [1], [0, 0, 1, 1], [], []>} : vector<8x128xbf16>, vector<128x128xbf16>, vector<8x128xf32> -> vector<8x128xf32>
    %51 = arith.addf %14, %50 : vector<8x128xf32>
    %c1 = arith.constant 1 : index
    %c0_22 = arith.constant 0 : index
    %c0_23 = arith.constant 0 : index
    %52 = vector.load %arg1[%c1, %c0_22, %c0_23] : memref<8x8x512xf32, #tpu.memory_space<vmem>>, vector<1x8x512xf32>
    %53 = vector.shape_cast %52 : vector<1x8x512xf32> to vector<8x512xf32>
    %54 = arith.truncf %47 : vector<8x128xf32> to vector<8x128xbf16>
    %cst_24 = arith.constant dense<0.000000e+00> : vector<8x512xf32>
    %55 = tpu.matmul %54, %15, %cst_24 {dimension_numbers = #tpu.dot_dimension_numbers<[1], [0], [0], [1], [0, 0, 1, 1], [], []>} : vector<8x128xbf16>, vector<128x512xbf16>, vector<8x512xf32> -> vector<8x512xf32>
    %56 = arith.addf %53, %55 : vector<8x512xf32>
    %57 = vector.extract_strided_slice %56 {offsets = [0, 0], sizes = [8, 128], strides = [1, 1]} : vector<8x512xf32> to vector<8x128xf32>
    %58 = arith.negf %57 : vector<8x128xf32>
    %59 = math.exp %58 : vector<8x128xf32>
    %cst_25 = arith.constant 1.000000e+00 : f32
    %60 = vector.broadcast %cst_25 : f32 to vector<8x128xf32>
    %61 = arith.addf %60, %59 : vector<8x128xf32>
    %62 = arith.divf %60, %61 : vector<8x128xf32>
    %63 = vector.extract_strided_slice %56 {offsets = [0, 128], sizes = [8, 128], strides = [1, 1]} : vector<8x512xf32> to vector<8x128xf32>
    %64 = arith.negf %63 : vector<8x128xf32>
    %65 = math.exp %64 : vector<8x128xf32>
    %cst_26 = arith.constant 1.000000e+00 : f32
    %66 = vector.broadcast %cst_26 : f32 to vector<8x128xf32>
    %67 = arith.addf %66, %65 : vector<8x128xf32>
    %68 = arith.divf %66, %67 : vector<8x128xf32>
    %69 = vector.extract_strided_slice %56 {offsets = [0, 256], sizes = [8, 128], strides = [1, 1]} : vector<8x512xf32> to vector<8x128xf32>
    %70 = math.tanh %69 : vector<8x128xf32>
    %71 = vector.extract_strided_slice %56 {offsets = [0, 384], sizes = [8, 128], strides = [1, 1]} : vector<8x512xf32> to vector<8x128xf32>
    %72 = arith.negf %71 : vector<8x128xf32>
    %73 = math.exp %72 : vector<8x128xf32>
    %cst_27 = arith.constant 1.000000e+00 : f32
    %74 = vector.broadcast %cst_27 : f32 to vector<8x128xf32>
    %75 = arith.addf %74, %73 : vector<8x128xf32>
    %76 = arith.divf %74, %75 : vector<8x128xf32>
    %77 = arith.mulf %68, %45 : vector<8x128xf32>
    %78 = arith.mulf %62, %70 : vector<8x128xf32>
    %79 = arith.addf %77, %78 : vector<8x128xf32>
    %80 = math.tanh %79 : vector<8x128xf32>
    %81 = arith.mulf %76, %80 : vector<8x128xf32>
    %82 = arith.truncf %81 : vector<8x128xf32> to vector<8x128xbf16>
    %c128 = arith.constant 128 : index
    %c0_28 = arith.constant 0 : index
    %83 = vector.load %arg5[%c128, %c0_28] : memref<1024x128xbf16, #tpu.memory_space<vmem>>, vector<128x128xbf16>
    %cst_29 = arith.constant dense<0.000000e+00> : vector<8x128xf32>
    %84 = tpu.matmul %82, %83, %cst_29 {dimension_numbers = #tpu.dot_dimension_numbers<[1], [0], [0], [1], [0, 0, 1, 1], [], []>} : vector<8x128xbf16>, vector<128x128xbf16>, vector<8x128xf32> -> vector<8x128xf32>
    %85 = arith.addf %51, %84 : vector<8x128xf32>
    %c2 = arith.constant 2 : index
    %c0_30 = arith.constant 0 : index
    %c0_31 = arith.constant 0 : index
    %86 = vector.load %arg1[%c2, %c0_30, %c0_31] : memref<8x8x512xf32, #tpu.memory_space<vmem>>, vector<1x8x512xf32>
    %87 = vector.shape_cast %86 : vector<1x8x512xf32> to vector<8x512xf32>
    %88 = arith.truncf %81 : vector<8x128xf32> to vector<8x128xbf16>
    %cst_32 = arith.constant dense<0.000000e+00> : vector<8x512xf32>
    %89 = tpu.matmul %88, %15, %cst_32 {dimension_numbers = #tpu.dot_dimension_numbers<[1], [0], [0], [1], [0, 0, 1, 1], [], []>} : vector<8x128xbf16>, vector<128x512xbf16>, vector<8x512xf32> -> vector<8x512xf32>
    %90 = arith.addf %87, %89 : vector<8x512xf32>
    %91 = vector.extract_strided_slice %90 {offsets = [0, 0], sizes = [8, 128], strides = [1, 1]} : vector<8x512xf32> to vector<8x128xf32>
    %92 = arith.negf %91 : vector<8x128xf32>
    %93 = math.exp %92 : vector<8x128xf32>
    %cst_33 = arith.constant 1.000000e+00 : f32
    %94 = vector.broadcast %cst_33 : f32 to vector<8x128xf32>
    %95 = arith.addf %94, %93 : vector<8x128xf32>
    %96 = arith.divf %94, %95 : vector<8x128xf32>
    %97 = vector.extract_strided_slice %90 {offsets = [0, 128], sizes = [8, 128], strides = [1, 1]} : vector<8x512xf32> to vector<8x128xf32>
    %98 = arith.negf %97 : vector<8x128xf32>
    %99 = math.exp %98 : vector<8x128xf32>
    %cst_34 = arith.constant 1.000000e+00 : f32
    %100 = vector.broadcast %cst_34 : f32 to vector<8x128xf32>
    %101 = arith.addf %100, %99 : vector<8x128xf32>
    %102 = arith.divf %100, %101 : vector<8x128xf32>
    %103 = vector.extract_strided_slice %90 {offsets = [0, 256], sizes = [8, 128], strides = [1, 1]} : vector<8x512xf32> to vector<8x128xf32>
    %104 = math.tanh %103 : vector<8x128xf32>
    %105 = vector.extract_strided_slice %90 {offsets = [0, 384], sizes = [8, 128], strides = [1, 1]} : vector<8x512xf32> to vector<8x128xf32>
    %106 = arith.negf %105 : vector<8x128xf32>
    %107 = math.exp %106 : vector<8x128xf32>
    %cst_35 = arith.constant 1.000000e+00 : f32
    %108 = vector.broadcast %cst_35 : f32 to vector<8x128xf32>
    %109 = arith.addf %108, %107 : vector<8x128xf32>
    %110 = arith.divf %108, %109 : vector<8x128xf32>
    %111 = arith.mulf %102, %79 : vector<8x128xf32>
    %112 = arith.mulf %96, %104 : vector<8x128xf32>
    %113 = arith.addf %111, %112 : vector<8x128xf32>
    %114 = math.tanh %113 : vector<8x128xf32>
    %115 = arith.mulf %110, %114 : vector<8x128xf32>
    %116 = arith.truncf %115 : vector<8x128xf32> to vector<8x128xbf16>
    %c256 = arith.constant 256 : index
    %c0_36 = arith.constant 0 : index
    %117 = vector.load %arg5[%c256, %c0_36] : memref<1024x128xbf16, #tpu.memory_space<vmem>>, vector<128x128xbf16>
    %cst_37 = arith.constant dense<0.000000e+00> : vector<8x128xf32>
    %118 = tpu.matmul %116, %117, %cst_37 {dimension_numbers = #tpu.dot_dimension_numbers<[1], [0], [0], [1], [0, 0, 1, 1], [], []>} : vector<8x128xbf16>, vector<128x128xbf16>, vector<8x128xf32> -> vector<8x128xf32>
    %119 = arith.addf %85, %118 : vector<8x128xf32>
    %c3 = arith.constant 3 : index
    %c0_38 = arith.constant 0 : index
    %c0_39 = arith.constant 0 : index
    %120 = vector.load %arg1[%c3, %c0_38, %c0_39] : memref<8x8x512xf32, #tpu.memory_space<vmem>>, vector<1x8x512xf32>
    %121 = vector.shape_cast %120 : vector<1x8x512xf32> to vector<8x512xf32>
    %122 = arith.truncf %115 : vector<8x128xf32> to vector<8x128xbf16>
    %cst_40 = arith.constant dense<0.000000e+00> : vector<8x512xf32>
    %123 = tpu.matmul %122, %15, %cst_40 {dimension_numbers = #tpu.dot_dimension_numbers<[1], [0], [0], [1], [0, 0, 1, 1], [], []>} : vector<8x128xbf16>, vector<128x512xbf16>, vector<8x512xf32> -> vector<8x512xf32>
    %124 = arith.addf %121, %123 : vector<8x512xf32>
    %125 = vector.extract_strided_slice %124 {offsets = [0, 0], sizes = [8, 128], strides = [1, 1]} : vector<8x512xf32> to vector<8x128xf32>
    %126 = arith.negf %125 : vector<8x128xf32>
    %127 = math.exp %126 : vector<8x128xf32>
    %cst_41 = arith.constant 1.000000e+00 : f32
    %128 = vector.broadcast %cst_41 : f32 to vector<8x128xf32>
    %129 = arith.addf %128, %127 : vector<8x128xf32>
    %130 = arith.divf %128, %129 : vector<8x128xf32>
    %131 = vector.extract_strided_slice %124 {offsets = [0, 128], sizes = [8, 128], strides = [1, 1]} : vector<8x512xf32> to vector<8x128xf32>
    %132 = arith.negf %131 : vector<8x128xf32>
    %133 = math.exp %132 : vector<8x128xf32>
    %cst_42 = arith.constant 1.000000e+00 : f32
    %134 = vector.broadcast %cst_42 : f32 to vector<8x128xf32>
    %135 = arith.addf %134, %133 : vector<8x128xf32>
    %136 = arith.divf %134, %135 : vector<8x128xf32>
    %137 = vector.extract_strided_slice %124 {offsets = [0, 256], sizes = [8, 128], strides = [1, 1]} : vector<8x512xf32> to vector<8x128xf32>
    %138 = math.tanh %137 : vector<8x128xf32>
    %139 = vector.extract_strided_slice %124 {offsets = [0, 384], sizes = [8, 128], strides = [1, 1]} : vector<8x512xf32> to vector<8x128xf32>
    %140 = arith.negf %139 : vector<8x128xf32>
    %141 = math.exp %140 : vector<8x128xf32>
    %cst_43 = arith.constant 1.000000e+00 : f32
    %142 = vector.broadcast %cst_43 : f32 to vector<8x128xf32>
    %143 = arith.addf %142, %141 : vector<8x128xf32>
    %144 = arith.divf %142, %143 : vector<8x128xf32>
    %145 = arith.mulf %136, %113 : vector<8x128xf32>
    %146 = arith.mulf %130, %138 : vector<8x128xf32>
    %147 = arith.addf %145, %146 : vector<8x128xf32>
    %148 = math.tanh %147 : vector<8x128xf32>
    %149 = arith.mulf %144, %148 : vector<8x128xf32>
    %150 = arith.truncf %149 : vector<8x128xf32> to vector<8x128xbf16>
    %c384 = arith.constant 384 : index
    %c0_44 = arith.constant 0 : index
    %151 = vector.load %arg5[%c384, %c0_44] : memref<1024x128xbf16, #tpu.memory_space<vmem>>, vector<128x128xbf16>
    %cst_45 = arith.constant dense<0.000000e+00> : vector<8x128xf32>
    %152 = tpu.matmul %150, %151, %cst_45 {dimension_numbers = #tpu.dot_dimension_numbers<[1], [0], [0], [1], [0, 0, 1, 1], [], []>} : vector<8x128xbf16>, vector<128x128xbf16>, vector<8x128xf32> -> vector<8x128xf32>
    %153 = arith.addf %119, %152 : vector<8x128xf32>
    %c4 = arith.constant 4 : index
    %c0_46 = arith.constant 0 : index
    %c0_47 = arith.constant 0 : index
    %154 = vector.load %arg1[%c4, %c0_46, %c0_47] : memref<8x8x512xf32, #tpu.memory_space<vmem>>, vector<1x8x512xf32>
    %155 = vector.shape_cast %154 : vector<1x8x512xf32> to vector<8x512xf32>
    %156 = arith.truncf %149 : vector<8x128xf32> to vector<8x128xbf16>
    %cst_48 = arith.constant dense<0.000000e+00> : vector<8x512xf32>
    %157 = tpu.matmul %156, %15, %cst_48 {dimension_numbers = #tpu.dot_dimension_numbers<[1], [0], [0], [1], [0, 0, 1, 1], [], []>} : vector<8x128xbf16>, vector<128x512xbf16>, vector<8x512xf32> -> vector<8x512xf32>
    %158 = arith.addf %155, %157 : vector<8x512xf32>
    %159 = vector.extract_strided_slice %158 {offsets = [0, 0], sizes = [8, 128], strides = [1, 1]} : vector<8x512xf32> to vector<8x128xf32>
    %160 = arith.negf %159 : vector<8x128xf32>
    %161 = math.exp %160 : vector<8x128xf32>
    %cst_49 = arith.constant 1.000000e+00 : f32
    %162 = vector.broadcast %cst_49 : f32 to vector<8x128xf32>
    %163 = arith.addf %162, %161 : vector<8x128xf32>
    %164 = arith.divf %162, %163 : vector<8x128xf32>
    %165 = vector.extract_strided_slice %158 {offsets = [0, 128], sizes = [8, 128], strides = [1, 1]} : vector<8x512xf32> to vector<8x128xf32>
    %166 = arith.negf %165 : vector<8x128xf32>
    %167 = math.exp %166 : vector<8x128xf32>
    %cst_50 = arith.constant 1.000000e+00 : f32
    %168 = vector.broadcast %cst_50 : f32 to vector<8x128xf32>
    %169 = arith.addf %168, %167 : vector<8x128xf32>
    %170 = arith.divf %168, %169 : vector<8x128xf32>
    %171 = vector.extract_strided_slice %158 {offsets = [0, 256], sizes = [8, 128], strides = [1, 1]} : vector<8x512xf32> to vector<8x128xf32>
    %172 = math.tanh %171 : vector<8x128xf32>
    %173 = vector.extract_strided_slice %158 {offsets = [0, 384], sizes = [8, 128], strides = [1, 1]} : vector<8x512xf32> to vector<8x128xf32>
    %174 = arith.negf %173 : vector<8x128xf32>
    %175 = math.exp %174 : vector<8x128xf32>
    %cst_51 = arith.constant 1.000000e+00 : f32
    %176 = vector.broadcast %cst_51 : f32 to vector<8x128xf32>
    %177 = arith.addf %176, %175 : vector<8x128xf32>
    %178 = arith.divf %176, %177 : vector<8x128xf32>
    %179 = arith.mulf %170, %147 : vector<8x128xf32>
    %180 = arith.mulf %164, %172 : vector<8x128xf32>
    %181 = arith.addf %179, %180 : vector<8x128xf32>
    %182 = math.tanh %181 : vector<8x128xf32>
    %183 = arith.mulf %178, %182 : vector<8x128xf32>
    %184 = arith.truncf %183 : vector<8x128xf32> to vector<8x128xbf16>
    %c512 = arith.constant 512 : index
    %c0_52 = arith.constant 0 : index
    %185 = vector.load %arg5[%c512, %c0_52] : memref<1024x128xbf16, #tpu.memory_space<vmem>>, vector<128x128xbf16>
    %cst_53 = arith.constant dense<0.000000e+00> : vector<8x128xf32>
    %186 = tpu.matmul %184, %185, %cst_53 {dimension_numbers = #tpu.dot_dimension_numbers<[1], [0], [0], [1], [0, 0, 1, 1], [], []>} : vector<8x128xbf16>, vector<128x128xbf16>, vector<8x128xf32> -> vector<8x128xf32>
    %187 = arith.addf %153, %186 : vector<8x128xf32>
    %c5 = arith.constant 5 : index
    %c0_54 = arith.constant 0 : index
    %c0_55 = arith.constant 0 : index
    %188 = vector.load %arg1[%c5, %c0_54, %c0_55] : memref<8x8x512xf32, #tpu.memory_space<vmem>>, vector<1x8x512xf32>
    %189 = vector.shape_cast %188 : vector<1x8x512xf32> to vector<8x512xf32>
    %190 = arith.truncf %183 : vector<8x128xf32> to vector<8x128xbf16>
    %cst_56 = arith.constant dense<0.000000e+00> : vector<8x512xf32>
    %191 = tpu.matmul %190, %15, %cst_56 {dimension_numbers = #tpu.dot_dimension_numbers<[1], [0], [0], [1], [0, 0, 1, 1], [], []>} : vector<8x128xbf16>, vector<128x512xbf16>, vector<8x512xf32> -> vector<8x512xf32>
    %192 = arith.addf %189, %191 : vector<8x512xf32>
    %193 = vector.extract_strided_slice %192 {offsets = [0, 0], sizes = [8, 128], strides = [1, 1]} : vector<8x512xf32> to vector<8x128xf32>
    %194 = arith.negf %193 : vector<8x128xf32>
    %195 = math.exp %194 : vector<8x128xf32>
    %cst_57 = arith.constant 1.000000e+00 : f32
    %196 = vector.broadcast %cst_57 : f32 to vector<8x128xf32>
    %197 = arith.addf %196, %195 : vector<8x128xf32>
    %198 = arith.divf %196, %197 : vector<8x128xf32>
    %199 = vector.extract_strided_slice %192 {offsets = [0, 128], sizes = [8, 128], strides = [1, 1]} : vector<8x512xf32> to vector<8x128xf32>
    %200 = arith.negf %199 : vector<8x128xf32>
    %201 = math.exp %200 : vector<8x128xf32>
    %cst_58 = arith.constant 1.000000e+00 : f32
    %202 = vector.broadcast %cst_58 : f32 to vector<8x128xf32>
    %203 = arith.addf %202, %201 : vector<8x128xf32>
    %204 = arith.divf %202, %203 : vector<8x128xf32>
    %205 = vector.extract_strided_slice %192 {offsets = [0, 256], sizes = [8, 128], strides = [1, 1]} : vector<8x512xf32> to vector<8x128xf32>
    %206 = math.tanh %205 : vector<8x128xf32>
    %207 = vector.extract_strided_slice %192 {offsets = [0, 384], sizes = [8, 128], strides = [1, 1]} : vector<8x512xf32> to vector<8x128xf32>
    %208 = arith.negf %207 : vector<8x128xf32>
    %209 = math.exp %208 : vector<8x128xf32>
    %cst_59 = arith.constant 1.000000e+00 : f32
    %210 = vector.broadcast %cst_59 : f32 to vector<8x128xf32>
    %211 = arith.addf %210, %209 : vector<8x128xf32>
    %212 = arith.divf %210, %211 : vector<8x128xf32>
    %213 = arith.mulf %204, %181 : vector<8x128xf32>
    %214 = arith.mulf %198, %206 : vector<8x128xf32>
    %215 = arith.addf %213, %214 : vector<8x128xf32>
    %216 = math.tanh %215 : vector<8x128xf32>
    %217 = arith.mulf %212, %216 : vector<8x128xf32>
    %218 = arith.truncf %217 : vector<8x128xf32> to vector<8x128xbf16>
    %c640 = arith.constant 640 : index
    %c0_60 = arith.constant 0 : index
    %219 = vector.load %arg5[%c640, %c0_60] : memref<1024x128xbf16, #tpu.memory_space<vmem>>, vector<128x128xbf16>
    %cst_61 = arith.constant dense<0.000000e+00> : vector<8x128xf32>
    %220 = tpu.matmul %218, %219, %cst_61 {dimension_numbers = #tpu.dot_dimension_numbers<[1], [0], [0], [1], [0, 0, 1, 1], [], []>} : vector<8x128xbf16>, vector<128x128xbf16>, vector<8x128xf32> -> vector<8x128xf32>
    %221 = arith.addf %187, %220 : vector<8x128xf32>
    %c6 = arith.constant 6 : index
    %c0_62 = arith.constant 0 : index
    %c0_63 = arith.constant 0 : index
    %222 = vector.load %arg1[%c6, %c0_62, %c0_63] : memref<8x8x512xf32, #tpu.memory_space<vmem>>, vector<1x8x512xf32>
    %223 = vector.shape_cast %222 : vector<1x8x512xf32> to vector<8x512xf32>
    %224 = arith.truncf %217 : vector<8x128xf32> to vector<8x128xbf16>
    %cst_64 = arith.constant dense<0.000000e+00> : vector<8x512xf32>
    %225 = tpu.matmul %224, %15, %cst_64 {dimension_numbers = #tpu.dot_dimension_numbers<[1], [0], [0], [1], [0, 0, 1, 1], [], []>} : vector<8x128xbf16>, vector<128x512xbf16>, vector<8x512xf32> -> vector<8x512xf32>
    %226 = arith.addf %223, %225 : vector<8x512xf32>
    %227 = vector.extract_strided_slice %226 {offsets = [0, 0], sizes = [8, 128], strides = [1, 1]} : vector<8x512xf32> to vector<8x128xf32>
    %228 = arith.negf %227 : vector<8x128xf32>
    %229 = math.exp %228 : vector<8x128xf32>
    %cst_65 = arith.constant 1.000000e+00 : f32
    %230 = vector.broadcast %cst_65 : f32 to vector<8x128xf32>
    %231 = arith.addf %230, %229 : vector<8x128xf32>
    %232 = arith.divf %230, %231 : vector<8x128xf32>
    %233 = vector.extract_strided_slice %226 {offsets = [0, 128], sizes = [8, 128], strides = [1, 1]} : vector<8x512xf32> to vector<8x128xf32>
    %234 = arith.negf %233 : vector<8x128xf32>
    %235 = math.exp %234 : vector<8x128xf32>
    %cst_66 = arith.constant 1.000000e+00 : f32
    %236 = vector.broadcast %cst_66 : f32 to vector<8x128xf32>
    %237 = arith.addf %236, %235 : vector<8x128xf32>
    %238 = arith.divf %236, %237 : vector<8x128xf32>
    %239 = vector.extract_strided_slice %226 {offsets = [0, 256], sizes = [8, 128], strides = [1, 1]} : vector<8x512xf32> to vector<8x128xf32>
    %240 = math.tanh %239 : vector<8x128xf32>
    %241 = vector.extract_strided_slice %226 {offsets = [0, 384], sizes = [8, 128], strides = [1, 1]} : vector<8x512xf32> to vector<8x128xf32>
    %242 = arith.negf %241 : vector<8x128xf32>
    %243 = math.exp %242 : vector<8x128xf32>
    %cst_67 = arith.constant 1.000000e+00 : f32
    %244 = vector.broadcast %cst_67 : f32 to vector<8x128xf32>
    %245 = arith.addf %244, %243 : vector<8x128xf32>
    %246 = arith.divf %244, %245 : vector<8x128xf32>
    %247 = arith.mulf %238, %215 : vector<8x128xf32>
    %248 = arith.mulf %232, %240 : vector<8x128xf32>
    %249 = arith.addf %247, %248 : vector<8x128xf32>
    %250 = math.tanh %249 : vector<8x128xf32>
    %251 = arith.mulf %246, %250 : vector<8x128xf32>
    %252 = arith.truncf %251 : vector<8x128xf32> to vector<8x128xbf16>
    %c768 = arith.constant 768 : index
    %c0_68 = arith.constant 0 : index
    %253 = vector.load %arg5[%c768, %c0_68] : memref<1024x128xbf16, #tpu.memory_space<vmem>>, vector<128x128xbf16>
    %cst_69 = arith.constant dense<0.000000e+00> : vector<8x128xf32>
    %254 = tpu.matmul %252, %253, %cst_69 {dimension_numbers = #tpu.dot_dimension_numbers<[1], [0], [0], [1], [0, 0, 1, 1], [], []>} : vector<8x128xbf16>, vector<128x128xbf16>, vector<8x128xf32> -> vector<8x128xf32>
    %255 = arith.addf %221, %254 : vector<8x128xf32>
    %c7 = arith.constant 7 : index
    %c0_70 = arith.constant 0 : index
    %c0_71 = arith.constant 0 : index
    %256 = vector.load %arg1[%c7, %c0_70, %c0_71] : memref<8x8x512xf32, #tpu.memory_space<vmem>>, vector<1x8x512xf32>
    %257 = vector.shape_cast %256 : vector<1x8x512xf32> to vector<8x512xf32>
    %258 = arith.truncf %251 : vector<8x128xf32> to vector<8x128xbf16>
    %cst_72 = arith.constant dense<0.000000e+00> : vector<8x512xf32>
    %259 = tpu.matmul %258, %15, %cst_72 {dimension_numbers = #tpu.dot_dimension_numbers<[1], [0], [0], [1], [0, 0, 1, 1], [], []>} : vector<8x128xbf16>, vector<128x512xbf16>, vector<8x512xf32> -> vector<8x512xf32>
    %260 = arith.addf %257, %259 : vector<8x512xf32>
    %261 = vector.extract_strided_slice %260 {offsets = [0, 0], sizes = [8, 128], strides = [1, 1]} : vector<8x512xf32> to vector<8x128xf32>
    %262 = arith.negf %261 : vector<8x128xf32>
    %263 = math.exp %262 : vector<8x128xf32>
    %cst_73 = arith.constant 1.000000e+00 : f32
    %264 = vector.broadcast %cst_73 : f32 to vector<8x128xf32>
    %265 = arith.addf %264, %263 : vector<8x128xf32>
    %266 = arith.divf %264, %265 : vector<8x128xf32>
    %267 = vector.extract_strided_slice %260 {offsets = [0, 128], sizes = [8, 128], strides = [1, 1]} : vector<8x512xf32> to vector<8x128xf32>
    %268 = arith.negf %267 : vector<8x128xf32>
    %269 = math.exp %268 : vector<8x128xf32>
    %cst_74 = arith.constant 1.000000e+00 : f32
    %270 = vector.broadcast %cst_74 : f32 to vector<8x128xf32>
    %271 = arith.addf %270, %269 : vector<8x128xf32>
    %272 = arith.divf %270, %271 : vector<8x128xf32>
    %273 = vector.extract_strided_slice %260 {offsets = [0, 256], sizes = [8, 128], strides = [1, 1]} : vector<8x512xf32> to vector<8x128xf32>
    %274 = math.tanh %273 : vector<8x128xf32>
    %275 = vector.extract_strided_slice %260 {offsets = [0, 384], sizes = [8, 128], strides = [1, 1]} : vector<8x512xf32> to vector<8x128xf32>
    %276 = arith.negf %275 : vector<8x128xf32>
    %277 = math.exp %276 : vector<8x128xf32>
    %cst_75 = arith.constant 1.000000e+00 : f32
    %278 = vector.broadcast %cst_75 : f32 to vector<8x128xf32>
    %279 = arith.addf %278, %277 : vector<8x128xf32>
    %280 = arith.divf %278, %279 : vector<8x128xf32>
    %281 = arith.mulf %272, %249 : vector<8x128xf32>
    %282 = arith.mulf %266, %274 : vector<8x128xf32>
    %283 = arith.addf %281, %282 : vector<8x128xf32>
    %284 = math.tanh %283 : vector<8x128xf32>
    %285 = arith.mulf %280, %284 : vector<8x128xf32>
    %286 = arith.truncf %285 : vector<8x128xf32> to vector<8x128xbf16>
    %c896 = arith.constant 896 : index
    %c0_76 = arith.constant 0 : index
    %287 = vector.load %arg5[%c896, %c0_76] : memref<1024x128xbf16, #tpu.memory_space<vmem>>, vector<128x128xbf16>
    %cst_77 = arith.constant dense<0.000000e+00> : vector<8x128xf32>
    %288 = tpu.matmul %286, %287, %cst_77 {dimension_numbers = #tpu.dot_dimension_numbers<[1], [0], [0], [1], [0, 0, 1, 1], [], []>} : vector<8x128xbf16>, vector<128x128xbf16>, vector<8x128xf32> -> vector<8x128xf32>
    %289 = arith.addf %255, %288 : vector<8x128xf32>
    %c0_78 = arith.constant 0 : index
    %c0_79 = arith.constant 0 : index
    %290 = vector.load %arg8[%c0_78, %c0_79] : memref<8x128xf32, #tpu.memory_space<vmem>>, vector<8x128xf32>
    tpu.vector_store %arg8[%c0_78, %c0_79], %289 {strides = array<i32>} : memref<8x128xf32, #tpu.memory_space<vmem>>, vector<8x128xf32>,
    return
  }
  func.func @transform_0(%arg0: i32) -> (i32, i32, i32) {
    %c0_i32 = arith.constant 0 : i32
    %c0_i32_0 = arith.constant 0 : i32
    %c0_i32_1 = arith.constant 0 : i32
    %c0_i32_2 = arith.constant 0 : i32
    return %c0_i32, %c0_i32_0, %c0_i32_1 : i32, i32, i32
  }
  func.func @transform_1(%arg0: i32) -> (i32, i32) {
    %c0_i32 = arith.constant 0 : i32
    %c0_i32_0 = arith.constant 0 : i32
    return %arg0, %c0_i32 : i32, i32
  }
  func.func @transform_2(%arg0: i32) -> (i32, i32) {
    %c0_i32 = arith.constant 0 : i32
    %c0_i32_0 = arith.constant 0 : i32
    %c0_i32_1 = arith.constant 0 : i32
    return %c0_i32, %c0_i32_0 : i32, i32
  }
  func.func @transform_3(%arg0: i32) -> (i32, i32) {
    %c0_i32 = arith.constant 0 : i32
    %c0_i32_0 = arith.constant 0 : i32
    %c0_i32_1 = arith.constant 0 : i32
    return %c0_i32, %c0_i32_0 : i32, i32
  }
  func.func @transform_4(%arg0: i32) -> (i32, i32) {
    %c0_i32 = arith.constant 0 : i32
    %c0_i32_0 = arith.constant 0 : i32
    %c0_i32_1 = arith.constant 0 : i32
    return %c0_i32, %c0_i32_0 : i32, i32
  }
  func.func @transform_5(%arg0: i32) -> (i32, i32) {
    %c0_i32 = arith.constant 0 : i32
    %c0_i32_0 = arith.constant 0 : i32
    %c0_i32_1 = arith.constant 0 : i32
    return %c0_i32, %c0_i32_0 : i32, i32
  }
  func.func @transform_6(%arg0: i32) -> (i32, i32) {
    %c0_i32 = arith.constant 0 : i32
    %c0_i32_0 = arith.constant 0 : i32
    %c0_i32_1 = arith.constant 0 : i32
    return %c0_i32, %c0_i32_0 : i32, i32
  }
  func.func @transform_7(%arg0: i32) -> (i32, i32) {
    %c0_i32 = arith.constant 0 : i32
    %c0_i32_0 = arith.constant 0 : i32
    return %arg0, %c0_i32 : i32, i32
  }
}

</mosaic_0001>

<llo_original>
// kernel: model_forward.1
$region0: #{model_forward.1}
  #allocation0 [shape = 'u32[]', space=smem, size = 0x4, offset = 0x4, fixed_abs, tag = 'smem constant byte address 0x4 - core index']
  #allocation1 [shape = 'u32[144,128]{1,0:T(1,128)}', space=vmem, size = 0x12000, scoped, tag = 'internal scratch']
  %s0 = inlined_call_operand.vmem [shape: f32[8,8,512], index: 0, kind: input, shape index: {}]
  %s1 = inlined_call_operand.vmem [shape: s32[8,1], index: 1, kind: input, shape index: {}]
  %s2 = inlined_call_operand.vmem [shape: bf16[128,512], index: 2, kind: input, shape index: {}]
  %s3 = inlined_call_operand.vmem [shape: bf16[10,8], index: 3, kind: input, shape index: {}]
  %s4 = inlined_call_operand.vmem [shape: bf16[1024,128], index: 4, kind: input, shape index: {}]
  %s5 = inlined_call_operand.vmem [shape: bf16[8,128], index: 5, kind: input, shape index: {}]
  %s6 = inlined_call_operand.vmem [shape: f32[1,128], index: 6, kind: input, shape index: {}]
  %s7 = inlined_call_operand.vmem [shape: f32[8,128], index: 7, kind: output, shape index: {}]
  %s8 = sld [smem:[#allocation0]]
  $region38: #{model_forward.1} parent=0
    _
  %s10 = ssub.s32 1, %s8
  %s11 = scalar_select 0, %s10, %s8
  // Predicated region
  $region2: #{model_forward.1} parent=0 // pred_check
    _
  $region3: #{model_forward.1} parent=0 // pred_check_branch
    %13 = sbr.rel (0) target = $region5
  $region4: #{model_forward.1} parent=0 // pred_region
    _
  $region5: #{model_forward.1} parent=0 // pred_fallthru
    _
  // Predicated region
  $region6: #{model_forward.1} parent=0 // pred_check
    _
  $region7: #{model_forward.1} parent=0 // pred_check_branch
    %15 = sbr.rel (0) target = $region9
  $region8: #{model_forward.1} parent=0 // pred_region
    _
  $region9: #{model_forward.1} parent=0 // pred_fallthru
    _
  // Predicated region
  $region10: #{model_forward.1} parent=0 // pred_check
    _
  $region11: #{model_forward.1} parent=0 // pred_check_branch
    %17 = sbr.rel (0) target = $region13
  $region12: #{model_forward.1} parent=0 // pred_region
    _
  $region13: #{model_forward.1} parent=0 // pred_fallthru
    _
  // Predicated region
  $region14: #{model_forward.1} parent=0 // pred_check
    _
  $region15: #{model_forward.1} parent=0 // pred_check_branch
    %19 = sbr.rel (0) target = $region17
  $region16: #{model_forward.1} parent=0 // pred_region
    _
  $region17: #{model_forward.1} parent=0 // pred_fallthru
    _
  // Predicated region
  $region18: #{model_forward.1} parent=0 // pred_check
    _
  $region19: #{model_forward.1} parent=0 // pred_check_branch
    %21 = sbr.rel (0) target = $region21
  $region20: #{model_forward.1} parent=0 // pred_region
    _
  $region21: #{model_forward.1} parent=0 // pred_fallthru
    _
  // Predicated region
  $region22: #{model_forward.1} parent=0 // pred_check
    _
  $region23: #{model_forward.1} parent=0 // pred_check_branch
    %23 = sbr.rel (0) target = $region25
  $region24: #{model_forward.1} parent=0 // pred_region
    _
  $region25: #{model_forward.1} parent=0 // pred_fallthru
    _
  // Predicated region
  $region26: #{model_forward.1} parent=0 // pred_check
    _
  $region27: #{model_forward.1} parent=0 // pred_check_branch
    %25 = sbr.rel (0) target = $region29
  $region28: #{model_forward.1} parent=0 // pred_region
    _
  $region29: #{model_forward.1} parent=0 // pred_fallthru
    _
  %v27 = vld [vmem:[%s1] sm:$0xff]
  %v28 = vlaneseq
  %v29 = vand.u32 %v28, 127
  %30 = vset.pattern.permute.xlu0 0
  %31 = vperm.xlu0 %30, %v27
  %v32 = vpop.permute.xlu0 %31
  %vm33 = vcmp.eq.s32.totalorder %v29, %v32
  %v34 = vsel %vm33, 1, 0
  %v35 = vcvt.s32.f32 %v34
  %v36 = vpack.c.bf16 %v35, %v35
  %v37 = vld [vmem:[%s3] sm:$0xf]
  %v38 = vld [vmem:[%s3 + $0x4] sm:$0x1]
  %v41 = vunpack.c.l.b16 %v37
  %v42 = vunpack.c.l.b16 %v38
  %v43 = vpack.c.b16 %v42, %v41
  %vm44 = vcmask 80896
  %v46 = vsel %vm44, %v36, 0
  %vm48 = vcmask 1044480
  %v50 = vsel %vm48, %v43, 0
  %52 = vmatprep.subr.bf16.mxu0 0
  %53 = vmatpush1.bf16.msra.mxu0 0
  %54 = vmatprep.subr.bf16.mxu0 0
  %55 = vmatpush1.bf16.msra.mxu0 0
  %56 = vmatprep.subr.bf16.mxu0 0
  %57 = vmatpush1.bf16.msra.mxu0 0
  %58 = vmatprep.subr.bf16.mxu0 0
  %59 = vmatpush1.bf16.msra.mxu0 0
  %60 = vmatprep.subr.bf16.mxu0 0
  %61 = vmatpush1.bf16.msra.mxu0 0
  %62 = vmatprep.subr.bf16.mxu0 0
  %63 = vmatpush1.bf16.msra.mxu0 0
  %64 = vmatprep.subr.bf16.mxu0 0
  %65 = vmatpush1.bf16.msra.mxu0 0
  %66 = vmatprep.subr.bf16.mxu0 0
  %67 = vmatpush1.bf16.msra.mxu0 %v50
  %68 = vmatprep.subr.bf16.mxu0 0
  %69 = vmatpush2.bf16.msra.mxu0 0
  %70 = vmatprep.subr.bf16.mxu0 0
  %71 = vmatpush2.bf16.msra.mxu0 0
  %72 = vmatprep.subr.bf16.mxu0 0
  %73 = vmatpush2.bf16.msra.mxu0 0
  %74 = vmatprep.subr.bf16.mxu0 0
  %75 = vmatpush2.bf16.msra.mxu0 0
  %76 = vmatprep.subr.bf16.mxu0 0
  %77 = vmatpush2.bf16.msra.mxu0 0
  %78 = vmatprep.subr.bf16.mxu0 0
  %79 = vmatpush2.bf16.msra.mxu0 0
  %80 = vmatprep.subr.bf16.mxu0 0
  %81 = vmatpush2.bf16.msra.mxu0 0
  %82 = vmatprep.subr.bf16.mxu0 0
  %83 = vmatpush2.bf16.msra.mxu0 0
  %84 = vmatprep.mubr.bf16.mxu0 0
  %85 = vmatmul.mubr.bf16.gmra.mxu0 %v46
  %v86 = vpop.f32.mrf.mxu0
  %v87 = vadd.f32 0.0, %v86
  %v88 = vpop.f32.mrf.mxu0
  %v89 = vpop.f32.mrf.mxu0
  %v90 = vpop.f32.mrf.mxu0
  %91 = vdwg.mxu0
  %v92 = vpack.c.bf16 %v87, %v87
  %v93 = vld [vmem:[%s5] sm:$0xf]
  %v94 = vld [vmem:[%s6] sm:$0x1]
  %v96 = vlaneseq
  %v97 = vshrl.u32 %v96, 7
  %v98 = vsub.s32 0, %v97
  %v99 = vrot.slane %v94, %v98
  %vm101 = vcmask 64512
  %v103 = vsel %vm101, %v92, 0
  %vm105 = vcmask 1043456
  %v107 = vsel %vm105, %v93, 0
  %109 = vmatprep.subr.bf16.mxu0 0
  %110 = vmatpush1.bf16.msra.mxu0 0
  %111 = vmatprep.subr.bf16.mxu0 0
  %112 = vmatpush1.bf16.msra.mxu0 0
  %113 = vmatprep.subr.bf16.mxu0 0
  %114 = vmatpush1.bf16.msra.mxu0 0
  %115 = vmatprep.subr.bf16.mxu0 0
  %116 = vmatpush1.bf16.msra.mxu0 0
  %117 = vmatprep.subr.bf16.mxu0 0
  %118 = vmatpush1.bf16.msra.mxu0 0
  %119 = vmatprep.subr.bf16.mxu0 0
  %120 = vmatpush1.bf16.msra.mxu0 0
  %121 = vmatprep.subr.bf16.mxu0 0
  %122 = vmatpush1.bf16.msra.mxu0 0
  %123 = vmatprep.subr.bf16.mxu0 0
  %124 = vmatpush1.bf16.msra.mxu0 %v107
  %125 = vmatprep.subr.bf16.mxu0 0
  %126 = vmatpush2.bf16.msra.mxu0 0
  %127 = vmatprep.subr.bf16.mxu0 0
  %128 = vmatpush2.bf16.msra.mxu0 0
  %129 = vmatprep.subr.bf16.mxu0 0
  %130 = vmatpush2.bf16.msra.mxu0 0
  %131 = vmatprep.subr.bf16.mxu0 0
  %132 = vmatpush2.bf16.msra.mxu0 0
  %133 = vmatprep.subr.bf16.mxu0 0
  %134 = vmatpush2.bf16.msra.mxu0 0
  %135 = vmatprep.subr.bf16.mxu0 0
  %136 = vmatpush2.bf16.msra.mxu0 0
  %137 = vmatprep.subr.bf16.mxu0 0
  %138 = vmatpush2.bf16.msra.mxu0 0
  %139 = vmatprep.subr.bf16.mxu0 0
  %140 = vmatpush2.bf16.msra.mxu0 0
  %141 = vmatprep.mubr.bf16.mxu0 0
  %142 = vmatmul.mubr.bf16.gmra.mxu0 %v103
  %v143 = vpop.f32.mrf.mxu0
  %v144 = vadd.f32 %v99, %v143
  %v145 = vpop.f32.mrf.mxu0
  %v146 = vpop.f32.mrf.mxu0
  %v147 = vpop.f32.mrf.mxu0
  %148 = vdwg.mxu0
  %v149 = vld [vmem:[%s2] sm:$0xff]
  %v150 = vld [vmem:[%s2 + $0x8] sm:$0xff]
  %v151 = vld [vmem:[%s2 + $0x10] sm:$0xff]
  %v152 = vld [vmem:[%s2 + $0x18] sm:$0xff]
  %v153 = vld [vmem:[%s2 + $0x20] sm:$0xff]
  %v154 = vld [vmem:[%s2 + $0x28] sm:$0xff]
  %v155 = vld [vmem:[%s2 + $0x30] sm:$0xff]
  %v156 = vld [vmem:[%s2 + $0x38] sm:$0xff]
  %v157 = vld [vmem:[%s2 + $0x40] sm:$0xff]
  %v158 = vld [vmem:[%s2 + $0x48] sm:$0xff]
  %v159 = vld [vmem:[%s2 + $0x50] sm:$0xff]
  %v160 = vld [vmem:[%s2 + $0x58] sm:$0xff]
  %v161 = vld [vmem:[%s2 + $0x60] sm:$0xff]
  %v162 = vld [vmem:[%s2 + $0x68] sm:$0xff]
  %v163 = vld [vmem:[%s2 + $0x70] sm:$0xff]
  %v164 = vld [vmem:[%s2 + $0x78] sm:$0xff]
  %v165 = vld [vmem:[%s2 + $0x80] sm:$0xff]
  %v166 = vld [vmem:[%s2 + $0x88] sm:$0xff]
  %v167 = vld [vmem:[%s2 + $0x90] sm:$0xff]
  %v168 = vld [vmem:[%s2 + $0x98] sm:$0xff]
  %v169 = vld [vmem:[%s2 + $0xa0] sm:$0xff]
  %v170 = vld [vmem:[%s2 + $0xa8] sm:$0xff]
  %v171 = vld [vmem:[%s2 + $0xb0] sm:$0xff]
  %v172 = vld [vmem:[%s2 + $0xb8] sm:$0xff]
  %v173 = vld [vmem:[%s2 + $0xc0] sm:$0xff]
  %v174 = vld [vmem:[%s2 + $0xc8] sm:$0xff]
  %v175 = vld [vmem:[%s2 + $0xd0] sm:$0xff]
  %v176 = vld [vmem:[%s2 + $0xd8] sm:$0xff]
  %v177 = vld [vmem:[%s2 + $0xe0] sm:$0xff]
  %v178 = vld [vmem:[%s2 + $0xe8] sm:$0xff]
  %v179 = vld [vmem:[%s2 + $0xf0] sm:$0xff]
  %v180 = vld [vmem:[%s2 + $0xf8] sm:$0xff]
  %v181 = vld [vmem:[%s0] sm:$0xff]
  %v182 = vld [vmem:[%s0 + $0x8] sm:$0xff]
  %v183 = vld [vmem:[%s0 + $0x10] sm:$0xff]
  %v184 = vld [vmem:[%s0 + $0x18] sm:$0xff]
  %v217 = vunpack.c.l.b16 %v149
  %v218 = vunpack.c.h.b16 %v149
  %v219 = vunpack.c.l.b16 %v150
  %v220 = vunpack.c.h.b16 %v150
  %v221 = vunpack.c.l.b16 %v151
  %v222 = vunpack.c.h.b16 %v151
  %v223 = vunpack.c.l.b16 %v152
  %v224 = vunpack.c.h.b16 %v152
  %v225 = vunpack.c.l.b16 %v153
  %v226 = vunpack.c.h.b16 %v153
  %v227 = vunpack.c.l.b16 %v154
  %v228 = vunpack.c.h.b16 %v154
  %v229 = vunpack.c.l.b16 %v155
  %v230 = vunpack.c.h.b16 %v155
  %v231 = vunpack.c.l.b16 %v156
  %v232 = vunpack.c.h.b16 %v156
  %v233 = vunpack.c.l.b16 %v157
  %v234 = vunpack.c.h.b16 %v157
  %v235 = vunpack.c.l.b16 %v158
  %v236 = vunpack.c.h.b16 %v158
  %v237 = vunpack.c.l.b16 %v159
  %v238 = vunpack.c.h.b16 %v159
  %v239 = vunpack.c.l.b16 %v160
  %v240 = vunpack.c.h.b16 %v160
  %v241 = vunpack.c.l.b16 %v161
  %v242 = vunpack.c.h.b16 %v161
  %v243 = vunpack.c.l.b16 %v162
  %v244 = vunpack.c.h.b16 %v162
  %v245 = vunpack.c.l.b16 %v163
  %v246 = vunpack.c.h.b16 %v163
  %v247 = vunpack.c.l.b16 %v164
  %v248 = vunpack.c.h.b16 %v164
  %v249 = vunpack.c.l.b16 %v165
  %v250 = vunpack.c.h.b16 %v165
  %v251 = vunpack.c.l.b16 %v166
  %v252 = vunpack.c.h.b16 %v166
  %v253 = vunpack.c.l.b16 %v167
  %v254 = vunpack.c.h.b16 %v167
  %v255 = vunpack.c.l.b16 %v168
  %v256 = vunpack.c.h.b16 %v168
  %v257 = vunpack.c.l.b16 %v169
  %v258 = vunpack.c.h.b16 %v169
  %v259 = vunpack.c.l.b16 %v170
  %v260 = vunpack.c.h.b16 %v170
  %v261 = vunpack.c.l.b16 %v171
  %v262 = vunpack.c.h.b16 %v171
  %v263 = vunpack.c.l.b16 %v172
  %v264 = vunpack.c.h.b16 %v172
  %v265 = vunpack.c.l.b16 %v173
  %v266 = vunpack.c.h.b16 %v173
  %v267 = vunpack.c.l.b16 %v174
  %v268 = vunpack.c.h.b16 %v174
  %v269 = vunpack.c.l.b16 %v175
  %v270 = vunpack.c.h.b16 %v175
  %v271 = vunpack.c.l.b16 %v176
  %v272 = vunpack.c.h.b16 %v176
  %v273 = vunpack.c.l.b16 %v177
  %v274 = vunpack.c.h.b16 %v177
  %v275 = vunpack.c.l.b16 %v178
  %v276 = vunpack.c.h.b16 %v178
  %v277 = vunpack.c.l.b16 %v179
  %v278 = vunpack.c.h.b16 %v179
  %v279 = vunpack.c.l.b16 %v180
  %v280 = vunpack.c.h.b16 %v180
  %v281 = vpack.c.b16 %v221, %v217
  %v282 = vpack.c.b16 %v222, %v218
  %v283 = vpack.c.b16 %v223, %v219
  %v284 = vpack.c.b16 %v224, %v220
  %v285 = vpack.c.b16 %v229, %v225
  %v286 = vpack.c.b16 %v230, %v226
  %v287 = vpack.c.b16 %v231, %v227
  %v288 = vpack.c.b16 %v232, %v228
  %v289 = vpack.c.b16 %v237, %v233
  %v290 = vpack.c.b16 %v238, %v234
  %v291 = vpack.c.b16 %v239, %v235
  %v292 = vpack.c.b16 %v240, %v236
  %v293 = vpack.c.b16 %v245, %v241
  %v294 = vpack.c.b16 %v246, %v242
  %v295 = vpack.c.b16 %v247, %v243
  %v296 = vpack.c.b16 %v248, %v244
  %v297 = vpack.c.b16 %v253, %v249
  %v298 = vpack.c.b16 %v254, %v250
  %v299 = vpack.c.b16 %v255, %v251
  %v300 = vpack.c.b16 %v256, %v252
  %v301 = vpack.c.b16 %v261, %v257
  %v302 = vpack.c.b16 %v262, %v258
  %v303 = vpack.c.b16 %v263, %v259
  %v304 = vpack.c.b16 %v264, %v260
  %v305 = vpack.c.b16 %v269, %v265
  %v306 = vpack.c.b16 %v270, %v266
  %v307 = vpack.c.b16 %v271, %v267
  %v308 = vpack.c.b16 %v272, %v268
  %v309 = vpack.c.b16 %v277, %v273
  %v310 = vpack.c.b16 %v278, %v274
  %v311 = vpack.c.b16 %v279, %v275
  %v312 = vpack.c.b16 %v280, %v276
  %345 = vmatprep.subr.bf16.mxu0 %v310
  %346 = vmatpush1.bf16.msra.mxu0 %v309
  %347 = vmatprep.subr.bf16.mxu0 %v306
  %348 = vmatpush1.bf16.msra.mxu0 %v305
  %349 = vmatprep.subr.bf16.mxu0 %v302
  %350 = vmatpush1.bf16.msra.mxu0 %v301
  %351 = vmatprep.subr.bf16.mxu0 %v298
  %352 = vmatpush1.bf16.msra.mxu0 %v297
  %353 = vmatprep.subr.bf16.mxu0 %v294
  %354 = vmatpush1.bf16.msra.mxu0 %v293
  %355 = vmatprep.subr.bf16.mxu0 %v290
  %356 = vmatpush1.bf16.msra.mxu0 %v289
  %357 = vmatprep.subr.bf16.mxu0 %v286
  %358 = vmatpush1.bf16.msra.mxu0 %v285
  %359 = vmatprep.subr.bf16.mxu0 %v282
  %360 = vmatpush1.bf16.msra.mxu0 %v281
  %361 = vmatprep.subr.bf16.mxu0 0
  %362 = vmatpush2.bf16.msra.mxu0 0
  %363 = vmatprep.subr.bf16.mxu0 0
  %364 = vmatpush2.bf16.msra.mxu0 0
  %365 = vmatprep.subr.bf16.mxu0 0
  %366 = vmatpush2.bf16.msra.mxu0 0
  %367 = vmatprep.subr.bf16.mxu0 0
  %368 = vmatpush2.bf16.msra.mxu0 0
  %369 = vmatprep.subr.bf16.mxu0 0
  %370 = vmatpush2.bf16.msra.mxu0 0
  %371 = vmatprep.subr.bf16.mxu0 0
  %372 = vmatpush2.bf16.msra.mxu0 0
  %373 = vmatprep.subr.bf16.mxu0 0
  %374 = vmatpush2.bf16.msra.mxu0 0
  %375 = vmatprep.subr.bf16.mxu0 0
  %376 = vmatpush2.bf16.msra.mxu0 0
  %377 = vmatprep.mubr.bf16.mxu0 0
  %378 = vmatmul.mubr.bf16.gmra.mxu0 0
  %v379 = vpop.f32.mrf.mxu0
  %v380 = vadd.f32 0.0, %v379
  %v381 = vpop.f32.mrf.mxu0
  %v382 = vadd.f32 0.0, %v381
  %v383 = vpop.f32.mrf.mxu0
  %v384 = vpop.f32.mrf.mxu0
  %385 = vdwg.mxu0
  %386 = vmatprep.subr.bf16.mxu0 %v312
  %387 = vmatpush1.bf16.msra.mxu0 %v311
  %388 = vmatprep.subr.bf16.mxu0 %v308
  %389 = vmatpush1.bf16.msra.mxu0 %v307
  %390 = vmatprep.subr.bf16.mxu0 %v304
  %391 = vmatpush1.bf16.msra.mxu0 %v303
  %392 = vmatprep.subr.bf16.mxu0 %v300
  %393 = vmatpush1.bf16.msra.mxu0 %v299
  %394 = vmatprep.subr.bf16.mxu0 %v296
  %395 = vmatpush1.bf16.msra.mxu0 %v295
  %396 = vmatprep.subr.bf16.mxu0 %v292
  %397 = vmatpush1.bf16.msra.mxu0 %v291
  %398 = vmatprep.subr.bf16.mxu0 %v288
  %399 = vmatpush1.bf16.msra.mxu0 %v287
  %400 = vmatprep.subr.bf16.mxu0 %v284
  %401 = vmatpush1.bf16.msra.mxu0 %v283
  %402 = vmatprep.subr.bf16.mxu0 0
  %403 = vmatpush2.bf16.msra.mxu0 0
  %404 = vmatprep.subr.bf16.mxu0 0
  %405 = vmatpush2.bf16.msra.mxu0 0
  %406 = vmatprep.subr.bf16.mxu0 0
  %407 = vmatpush2.bf16.msra.mxu0 0
  %408 = vmatprep.subr.bf16.mxu0 0
  %409 = vmatpush2.bf16.msra.mxu0 0
  %410 = vmatprep.subr.bf16.mxu0 0
  %411 = vmatpush2.bf16.msra.mxu0 0
  %412 = vmatprep.subr.bf16.mxu0 0
  %413 = vmatpush2.bf16.msra.mxu0 0
  %414 = vmatprep.subr.bf16.mxu0 0
  %415 = vmatpush2.bf16.msra.mxu0 0
  %416 = vmatprep.subr.bf16.mxu0 0
  %417 = vmatpush2.bf16.msra.mxu0 0
  %418 = vmatprep.mubr.bf16.mxu0 0
  %419 = vmatmul.mubr.bf16.gmra.mxu0 0
  %v420 = vpop.f32.mrf.mxu0
  %v421 = vadd.f32 0.0, %v420
  %v422 = vpop.f32.mrf.mxu0
  %v423 = vadd.f32 0.0, %v422
  %v424 = vpop.f32.mrf.mxu0
  %v425 = vpop.f32.mrf.mxu0
  %426 = vdwg.mxu0
  %v427 = vadd.f32 %v181, %v380
  %v428 = vadd.f32 %v182, %v382
  %v429 = vadd.f32 %v183, %v421
  %v430 = vadd.f32 %v184, %v423
  %v431 = vxor.u32 %v427, 2147483648
  %v432 = vmul.f32 %v431, 1.442695
  %v433 = vpow.pop %v432
  %v434 = vadd.f32 %v433, 1.0
  %v435 = vrcp.pop %v434
  %v436 = vmul.f32 1.0, %v435
  %v437 = vxor.u32 %v428, 2147483648
  %v438 = vmul.f32 %v437, 1.442695
  %v439 = vpow.pop %v438
  %v440 = vadd.f32 %v439, 1.0
  %v441 = vrcp.pop %v440
  %v442 = vmul.f32 1.0, %v441
  %v443 = vtanh.pop %v429
  %v444 = vxor.u32 %v430, 2147483648
  %v445 = vmul.f32 %v444, 1.442695
  %v446 = vpow.pop %v445
  %v447 = vadd.f32 %v446, 1.0
  %v448 = vrcp.pop %v447
  %v449 = vmul.f32 1.0, %v448
  %v450 = vmul.f32 %v442, 0.0
  %v451 = vmul.f32 %v436, %v443
  %v452 = vadd.f32 %v450, %v451
  %v453 = vtanh.pop %v452
  %v454 = vmul.f32 %v449, %v453
  %v455 = vpack.c.bf16 %v454, %v454
  %v456 = vld [vmem:[%s4] sm:$0xf]
  %v457 = vld [vmem:[%s4 + $0x4] sm:$0xf]
  %v458 = vld [vmem:[%s4 + $0x8] sm:$0xf]
  %v459 = vld [vmem:[%s4 + $0xc] sm:$0xf]
  %v460 = vld [vmem:[%s4 + $0x10] sm:$0xf]
  %v461 = vld [vmem:[%s4 + $0x14] sm:$0xf]
  %v462 = vld [vmem:[%s4 + $0x18] sm:$0xf]
  %v463 = vld [vmem:[%s4 + $0x1c] sm:$0xf]
  %v464 = vld [vmem:[%s4 + $0x20] sm:$0xf]
  %v465 = vld [vmem:[%s4 + $0x24] sm:$0xf]
  %v466 = vld [vmem:[%s4 + $0x28] sm:$0xf]
  %v467 = vld [vmem:[%s4 + $0x2c] sm:$0xf]
  %v468 = vld [vmem:[%s4 + $0x30] sm:$0xf]
  %v469 = vld [vmem:[%s4 + $0x34] sm:$0xf]
  %v470 = vld [vmem:[%s4 + $0x38] sm:$0xf]
  %v471 = vld [vmem:[%s4 + $0x3c] sm:$0xf]
  %v488 = vunpack.c.l.b16 %v456
  %v489 = vunpack.c.l.b16 %v457
  %v490 = vunpack.c.l.b16 %v458
  %v491 = vunpack.c.l.b16 %v459
  %v492 = vunpack.c.l.b16 %v460
  %v493 = vunpack.c.l.b16 %v461
  %v494 = vunpack.c.l.b16 %v462
  %v495 = vunpack.c.l.b16 %v463
  %v496 = vunpack.c.l.b16 %v464
  %v497 = vunpack.c.l.b16 %v465
  %v498 = vunpack.c.l.b16 %v466
  %v499 = vunpack.c.l.b16 %v467
  %v500 = vunpack.c.l.b16 %v468
  %v501 = vunpack.c.l.b16 %v469
  %v502 = vunpack.c.l.b16 %v470
  %v503 = vunpack.c.l.b16 %v471
  %v504 = vpack.c.b16 %v489, %v488
  %v505 = vpack.c.b16 %v491, %v490
  %v506 = vpack.c.b16 %v493, %v492
  %v507 = vpack.c.b16 %v495, %v494
  %v508 = vpack.c.b16 %v497, %v496
  %v509 = vpack.c.b16 %v499, %v498
  %v510 = vpack.c.b16 %v501, %v500
  %v511 = vpack.c.b16 %v503, %v502
  %520 = vmatprep.subr.bf16.mxu0 0
  %521 = vmatpush1.bf16.msra.mxu0 %v511
  %522 = vmatprep.subr.bf16.mxu0 0
  %523 = vmatpush1.bf16.msra.mxu0 %v510
  %524 = vmatprep.subr.bf16.mxu0 0
  %525 = vmatpush1.bf16.msra.mxu0 %v509
  %526 = vmatprep.subr.bf16.mxu0 0
  %527 = vmatpush1.bf16.msra.mxu0 %v508
  %528 = vmatprep.subr.bf16.mxu0 0
  %529 = vmatpush1.bf16.msra.mxu0 %v507
  %530 = vmatprep.subr.bf16.mxu0 0
  %531 = vmatpush1.bf16.msra.mxu0 %v506
  %532 = vmatprep.subr.bf16.mxu0 0
  %533 = vmatpush1.bf16.msra.mxu0 %v505
  %534 = vmatprep.subr.bf16.mxu0 0
  %535 = vmatpush1.bf16.msra.mxu0 %v504
  %536 = vmatprep.subr.bf16.mxu0 0
  %537 = vmatpush2.bf16.msra.mxu0 0
  %538 = vmatprep.subr.bf16.mxu0 0
  %539 = vmatpush2.bf16.msra.mxu0 0
  %540 = vmatprep.subr.bf16.mxu0 0
  %541 = vmatpush2.bf16.msra.mxu0 0
  %542 = vmatprep.subr.bf16.mxu0 0
  %543 = vmatpush2.bf16.msra.mxu0 0
  %544 = vmatprep.subr.bf16.mxu0 0
  %545 = vmatpush2.bf16.msra.mxu0 0
  %546 = vmatprep.subr.bf16.mxu0 0
  %547 = vmatpush2.bf16.msra.mxu0 0
  %548 = vmatprep.subr.bf16.mxu0 0
  %549 = vmatpush2.bf16.msra.mxu0 0
  %550 = vmatprep.subr.bf16.mxu0 0
  %551 = vmatpush2.bf16.msra.mxu0 0
  %552 = vmatprep.mubr.bf16.mxu0 0
  %553 = vmatmul.mubr.bf16.gmra.mxu0 %v455
  %v554 = vpop.f32.mrf.mxu0
  %v555 = vadd.f32 0.0, %v554
  %v556 = vpop.f32.mrf.mxu0
  %v557 = vpop.f32.mrf.mxu0
  %v558 = vpop.f32.mrf.mxu0
  %559 = vdwg.mxu0
  %v560 = vadd.f32 %v144, %v555
  %s561 = scalar_lea.vmem %s0, 32
  %v562 = vld [vmem:[%s561] sm:$0xff]
  %v563 = vld [vmem:[%s561 + $0x8] sm:$0xff]
  %v564 = vld [vmem:[%s561 + $0x10] sm:$0xff]
  %v565 = vld [vmem:[%s561 + $0x18] sm:$0xff]
  %566 = vmatprep.subr.bf16.mxu0 %v310
  %567 = vmatpush1.bf16.msra.mxu0 %v309
  %568 = vmatprep.subr.bf16.mxu0 %v306
  %569 = vmatpush1.bf16.msra.mxu0 %v305
  %570 = vmatprep.subr.bf16.mxu0 %v302
  %571 = vmatpush1.bf16.msra.mxu0 %v301
  %572 = vmatprep.subr.bf16.mxu0 %v298
  %573 = vmatpush1.bf16.msra.mxu0 %v297
  %574 = vmatprep.subr.bf16.mxu0 %v294
  %575 = vmatpush1.bf16.msra.mxu0 %v293
  %576 = vmatprep.subr.bf16.mxu0 %v290
  %577 = vmatpush1.bf16.msra.mxu0 %v289
  %578 = vmatprep.subr.bf16.mxu0 %v286
  %579 = vmatpush1.bf16.msra.mxu0 %v285
  %580 = vmatprep.subr.bf16.mxu0 %v282
  %581 = vmatpush1.bf16.msra.mxu0 %v281
  %582 = vmatprep.subr.bf16.mxu0 0
  %583 = vmatpush2.bf16.msra.mxu0 0
  %584 = vmatprep.subr.bf16.mxu0 0
  %585 = vmatpush2.bf16.msra.mxu0 0
  %586 = vmatprep.subr.bf16.mxu0 0
  %587 = vmatpush2.bf16.msra.mxu0 0
  %588 = vmatprep.subr.bf16.mxu0 0
  %589 = vmatpush2.bf16.msra.mxu0 0
  %590 = vmatprep.subr.bf16.mxu0 0
  %591 = vmatpush2.bf16.msra.mxu0 0
  %592 = vmatprep.subr.bf16.mxu0 0
  %593 = vmatpush2.bf16.msra.mxu0 0
  %594 = vmatprep.subr.bf16.mxu0 0
  %595 = vmatpush2.bf16.msra.mxu0 0
  %596 = vmatprep.subr.bf16.mxu0 0
  %597 = vmatpush2.bf16.msra.mxu0 0
  %598 = vmatprep.mubr.bf16.mxu0 0
  %599 = vmatmul.mubr.bf16.gmra.mxu0 %v455
  %v600 = vpop.f32.mrf.mxu0
  %v601 = vadd.f32 0.0, %v600
  %v602 = vpop.f32.mrf.mxu0
  %v603 = vadd.f32 0.0, %v602
  %v604 = vpop.f32.mrf.mxu0
  %v605 = vpop.f32.mrf.mxu0
  %606 = vdwg.mxu0
  %607 = vmatprep.subr.bf16.mxu0 %v312
  %608 = vmatpush1.bf16.msra.mxu0 %v311
  %609 = vmatprep.subr.bf16.mxu0 %v308
  %610 = vmatpush1.bf16.msra.mxu0 %v307
  %611 = vmatprep.subr.bf16.mxu0 %v304
  %612 = vmatpush1.bf16.msra.mxu0 %v303
  %613 = vmatprep.subr.bf16.mxu0 %v300
  %614 = vmatpush1.bf16.msra.mxu0 %v299
  %615 = vmatprep.subr.bf16.mxu0 %v296
  %616 = vmatpush1.bf16.msra.mxu0 %v295
  %617 = vmatprep.subr.bf16.mxu0 %v292
  %618 = vmatpush1.bf16.msra.mxu0 %v291
  %619 = vmatprep.subr.bf16.mxu0 %v288
  %620 = vmatpush1.bf16.msra.mxu0 %v287
  %621 = vmatprep.subr.bf16.mxu0 %v284
  %622 = vmatpush1.bf16.msra.mxu0 %v283
  %623 = vmatprep.subr.bf16.mxu0 0
  %624 = vmatpush2.bf16.msra.mxu0 0
  %625 = vmatprep.subr.bf16.mxu0 0
  %626 = vmatpush2.bf16.msra.mxu0 0
  %627 = vmatprep.subr.bf16.mxu0 0
  %628 = vmatpush2.bf16.msra.mxu0 0
  %629 = vmatprep.subr.bf16.mxu0 0
  %630 = vmatpush2.bf16.msra.mxu0 0
  %631 = vmatprep.subr.bf16.mxu0 0
  %632 = vmatpush2.bf16.msra.mxu0 0
  %633 = vmatprep.subr.bf16.mxu0 0
  %634 = vmatpush2.bf16.msra.mxu0 0
  %635 = vmatprep.subr.bf16.mxu0 0
  %636 = vmatpush2.bf16.msra.mxu0 0
  %637 = vmatprep.subr.bf16.mxu0 0
  %638 = vmatpush2.bf16.msra.mxu0 0
  %639 = vmatprep.mubr.bf16.mxu0 0
  %640 = vmatmul.mubr.bf16.gmra.mxu0 %v455
  %v641 = vpop.f32.mrf.mxu0
  %v642 = vadd.f32 0.0, %v641
  %v643 = vpop.f32.mrf.mxu0
  %v644 = vadd.f32 0.0, %v643
  %v645 = vpop.f32.mrf.mxu0
  %v646 = vpop.f32.mrf.mxu0
  %647 = vdwg.mxu0
  %v648 = vadd.f32 %v562, %v601
  %v649 = vadd.f32 %v563, %v603
  %v650 = vadd.f32 %v564, %v642
  %v651 = vadd.f32 %v565, %v644
  %v652 = vxor.u32 %v648, 2147483648
  %v653 = vmul.f32 %v652, 1.442695
  %v654 = vpow.pop %v653
  %v655 = vadd.f32 %v654, 1.0
  %v656 = vrcp.pop %v655
  %v657 = vmul.f32 1.0, %v656
  %v658 = vxor.u32 %v649, 2147483648
  %v659 = vmul.f32 %v658, 1.442695
  %v660 = vpow.pop %v659
  %v661 = vadd.f32 %v660, 1.0
  %v662 = vrcp.pop %v661
  %v663 = vmul.f32 1.0, %v662
  %v664 = vtanh.pop %v650
  %v665 = vxor.u32 %v651, 2147483648
  %v666 = vmul.f32 %v665, 1.442695
  %v667 = vpow.pop %v666
  %v668 = vadd.f32 %v667, 1.0
  %v669 = vrcp.pop %v668
  %v670 = vmul.f32 1.0, %v669
  %v671 = vmul.f32 %v663, %v452
  %v672 = vmul.f32 %v657, %v664
  %v673 = vadd.f32 %v671, %v672
  %v674 = vtanh.pop %v673
  %v675 = vmul.f32 %v670, %v674
  %v676 = vpack.c.bf16 %v675, %v675
  %v677 = vld [vmem:[%s4 + $0x40] sm:$0xf]
  %v678 = vld [vmem:[%s4 + $0x44] sm:$0xf]
  %v679 = vld [vmem:[%s4 + $0x48] sm:$0xf]
  %v680 = vld [vmem:[%s4 + $0x4c] sm:$0xf]
  %v681 = vld [vmem:[%s4 + $0x50] sm:$0xf]
  %v682 = vld [vmem:[%s4 + $0x54] sm:$0xf]
  %v683 = vld [vmem:[%s4 + $0x58] sm:$0xf]
  %v684 = vld [vmem:[%s4 + $0x5c] sm:$0xf]
  %v685 = vld [vmem:[%s4 + $0x60] sm:$0xf]
  %v686 = vld [vmem:[%s4 + $0x64] sm:$0xf]
  %v687 = vld [vmem:[%s4 + $0x68] sm:$0xf]
  %v688 = vld [vmem:[%s4 + $0x6c] sm:$0xf]
  %v689 = vld [vmem:[%s4 + $0x70] sm:$0xf]
  %v690 = vld [vmem:[%s4 + $0x74] sm:$0xf]
  %v691 = vld [vmem:[%s4 + $0x78] sm:$0xf]
  %v692 = vld [vmem:[%s4 + $0x7c] sm:$0xf]
  %v709 = vunpack.c.l.b16 %v677
  %v710 = vunpack.c.l.b16 %v678
  %v711 = vunpack.c.l.b16 %v679
  %v712 = vunpack.c.l.b16 %v680
  %v713 = vunpack.c.l.b16 %v681
  %v714 = vunpack.c.l.b16 %v682
  %v715 = vunpack.c.l.b16 %v683
  %v716 = vunpack.c.l.b16 %v684
  %v717 = vunpack.c.l.b16 %v685
  %v718 = vunpack.c.l.b16 %v686
  %v719 = vunpack.c.l.b16 %v687
  %v720 = vunpack.c.l.b16 %v688
  %v721 = vunpack.c.l.b16 %v689
  %v722 = vunpack.c.l.b16 %v690
  %v723 = vunpack.c.l.b16 %v691
  %v724 = vunpack.c.l.b16 %v692
  %v725 = vpack.c.b16 %v710, %v709
  %v726 = vpack.c.b16 %v712, %v711
  %v727 = vpack.c.b16 %v714, %v713
  %v728 = vpack.c.b16 %v716, %v715
  %v729 = vpack.c.b16 %v718, %v717
  %v730 = vpack.c.b16 %v720, %v719
  %v731 = vpack.c.b16 %v722, %v721
  %v732 = vpack.c.b16 %v724, %v723
  %741 = vmatprep.subr.bf16.mxu0 0
  %742 = vmatpush1.bf16.msra.mxu0 %v732
  %743 = vmatprep.subr.bf16.mxu0 0
  %744 = vmatpush1.bf16.msra.mxu0 %v731
  %745 = vmatprep.subr.bf16.mxu0 0
  %746 = vmatpush1.bf16.msra.mxu0 %v730
  %747 = vmatprep.subr.bf16.mxu0 0
  %748 = vmatpush1.bf16.msra.mxu0 %v729
  %749 = vmatprep.subr.bf16.mxu0 0
  %750 = vmatpush1.bf16.msra.mxu0 %v728
  %751 = vmatprep.subr.bf16.mxu0 0
  %752 = vmatpush1.bf16.msra.mxu0 %v727
  %753 = vmatprep.subr.bf16.mxu0 0
  %754 = vmatpush1.bf16.msra.mxu0 %v726
  %755 = vmatprep.subr.bf16.mxu0 0
  %756 = vmatpush1.bf16.msra.mxu0 %v725
  %757 = vmatprep.subr.bf16.mxu0 0
  %758 = vmatpush2.bf16.msra.mxu0 0
  %759 = vmatprep.subr.bf16.mxu0 0
  %760 = vmatpush2.bf16.msra.mxu0 0
  %761 = vmatprep.subr.bf16.mxu0 0
  %762 = vmatpush2.bf16.msra.mxu0 0
  %763 = vmatprep.subr.bf16.mxu0 0
  %764 = vmatpush2.bf16.msra.mxu0 0
  %765 = vmatprep.subr.bf16.mxu0 0
  %766 = vmatpush2.bf16.msra.mxu0 0
  %767 = vmatprep.subr.bf16.mxu0 0
  %768 = vmatpush2.bf16.msra.mxu0 0
  %769 = vmatprep.subr.bf16.mxu0 0
  %770 = vmatpush2.bf16.msra.mxu0 0
  %771 = vmatprep.subr.bf16.mxu0 0
  %772 = vmatpush2.bf16.msra.mxu0 0
  %773 = vmatprep.mubr.bf16.mxu0 0
  %774 = vmatmul.mubr.bf16.gmra.mxu0 %v676
  %v775 = vpop.f32.mrf.mxu0
  %v776 = vadd.f32 0.0, %v775
  %v777 = vpop.f32.mrf.mxu0
  %v778 = vpop.f32.mrf.mxu0
  %v779 = vpop.f32.mrf.mxu0
  %780 = vdwg.mxu0
  %v781 = vadd.f32 %v560, %v776
  %s782 = scalar_lea.vmem %s0, 64
  %v783 = vld [vmem:[%s782] sm:$0xff]
  %v784 = vld [vmem:[%s782 + $0x8] sm:$0xff]
  %v785 = vld [vmem:[%s782 + $0x10] sm:$0xff]
  %v786 = vld [vmem:[%s782 + $0x18] sm:$0xff]
  %787 = vmatprep.subr.bf16.mxu0 %v310
  %788 = vmatpush1.bf16.msra.mxu0 %v309
  %789 = vmatprep.subr.bf16.mxu0 %v306
  %790 = vmatpush1.bf16.msra.mxu0 %v305
  %791 = vmatprep.subr.bf16.mxu0 %v302
  %792 = vmatpush1.bf16.msra.mxu0 %v301
  %793 = vmatprep.subr.bf16.mxu0 %v298
  %794 = vmatpush1.bf16.msra.mxu0 %v297
  %795 = vmatprep.subr.bf16.mxu0 %v294
  %796 = vmatpush1.bf16.msra.mxu0 %v293
  %797 = vmatprep.subr.bf16.mxu0 %v290
  %798 = vmatpush1.bf16.msra.mxu0 %v289
  %799 = vmatprep.subr.bf16.mxu0 %v286
  %800 = vmatpush1.bf16.msra.mxu0 %v285
  %801 = vmatprep.subr.bf16.mxu0 %v282
  %802 = vmatpush1.bf16.msra.mxu0 %v281
  %803 = vmatprep.subr.bf16.mxu0 0
  %804 = vmatpush2.bf16.msra.mxu0 0
  %805 = vmatprep.subr.bf16.mxu0 0
  %806 = vmatpush2.bf16.msra.mxu0 0
  %807 = vmatprep.subr.bf16.mxu0 0
  %808 = vmatpush2.bf16.msra.mxu0 0
  %809 = vmatprep.subr.bf16.mxu0 0
  %810 = vmatpush2.bf16.msra.mxu0 0
  %811 = vmatprep.subr.bf16.mxu0 0
  %812 = vmatpush2.bf16.msra.mxu0 0
  %813 = vmatprep.subr.bf16.mxu0 0
  %814 = vmatpush2.bf16.msra.mxu0 0
  %815 = vmatprep.subr.bf16.mxu0 0
  %816 = vmatpush2.bf16.msra.mxu0 0
  %817 = vmatprep.subr.bf16.mxu0 0
  %818 = vmatpush2.bf16.msra.mxu0 0
  %819 = vmatprep.mubr.bf16.mxu0 0
  %820 = vmatmul.mubr.bf16.gmra.mxu0 %v676
  %v821 = vpop.f32.mrf.mxu0
  %v822 = vadd.f32 0.0, %v821
  %v823 = vpop.f32.mrf.mxu0
  %v824 = vadd.f32 0.0, %v823
  %v825 = vpop.f32.mrf.mxu0
  %v826 = vpop.f32.mrf.mxu0
  %827 = vdwg.mxu0
  %828 = vmatprep.subr.bf16.mxu0 %v312
  %829 = vmatpush1.bf16.msra.mxu0 %v311
  %830 = vmatprep.subr.bf16.mxu0 %v308
  %831 = vmatpush1.bf16.msra.mxu0 %v307
  %832 = vmatprep.subr.bf16.mxu0 %v304
  %833 = vmatpush1.bf16.msra.mxu0 %v303
  %834 = vmatprep.subr.bf16.mxu0 %v300
  %835 = vmatpush1.bf16.msra.mxu0 %v299
  %836 = vmatprep.subr.bf16.mxu0 %v296
  %837 = vmatpush1.bf16.msra.mxu0 %v295
  %838 = vmatprep.subr.bf16.mxu0 %v292
  %839 = vmatpush1.bf16.msra.mxu0 %v291
  %840 = vmatprep.subr.bf16.mxu0 %v288
  %841 = vmatpush1.bf16.msra.mxu0 %v287
  %842 = vmatprep.subr.bf16.mxu0 %v284
  %843 = vmatpush1.bf16.msra.mxu0 %v283
  %844 = vmatprep.subr.bf16.mxu0 0
  %845 = vmatpush2.bf16.msra.mxu0 0
  %846 = vmatprep.subr.bf16.mxu0 0
  %847 = vmatpush2.bf16.msra.mxu0 0
  %848 = vmatprep.subr.bf16.mxu0 0
  %849 = vmatpush2.bf16.msra.mxu0 0
  %850 = vmatprep.subr.bf16.mxu0 0
  %851 = vmatpush2.bf16.msra.mxu0 0
  %852 = vmatprep.subr.bf16.mxu0 0
  %853 = vmatpush2.bf16.msra.mxu0 0
  %854 = vmatprep.subr.bf16.mxu0 0
  %855 = vmatpush2.bf16.msra.mxu0 0
  %856 = vmatprep.subr.bf16.mxu0 0
  %857 = vmatpush2.bf16.msra.mxu0 0
  %858 = vmatprep.subr.bf16.mxu0 0
  %859 = vmatpush2.bf16.msra.mxu0 0
  %860 = vmatprep.mubr.bf16.mxu0 0
  %861 = vmatmul.mubr.bf16.gmra.mxu0 %v676
  %v862 = vpop.f32.mrf.mxu0
  %v863 = vadd.f32 0.0, %v862
  %v864 = vpop.f32.mrf.mxu0
  %v865 = vadd.f32 0.0, %v864
  %v866 = vpop.f32.mrf.mxu0
  %v867 = vpop.f32.mrf.mxu0
  %868 = vdwg.mxu0
  %v869 = vadd.f32 %v783, %v822
  %v870 = vadd.f32 %v784, %v824
  %v871 = vadd.f32 %v785, %v863
  %v872 = vadd.f32 %v786, %v865
  %v873 = vxor.u32 %v869, 2147483648
  %v874 = vmul.f32 %v873, 1.442695
  %v875 = vpow.pop %v874
  %v876 = vadd.f32 %v875, 1.0
  %v877 = vrcp.pop %v876
  %v878 = vmul.f32 1.0, %v877
  %v879 = vxor.u32 %v870, 2147483648
  %v880 = vmul.f32 %v879, 1.442695
  %v881 = vpow.pop %v880
  %v882 = vadd.f32 %v881, 1.0
  %v883 = vrcp.pop %v882
  %v884 = vmul.f32 1.0, %v883
  %v885 = vtanh.pop %v871
  %v886 = vxor.u32 %v872, 2147483648
  %v887 = vmul.f32 %v886, 1.442695
  %v888 = vpow.pop %v887
  %v889 = vadd.f32 %v888, 1.0
  %v890 = vrcp.pop %v889
  %v891 = vmul.f32 1.0, %v890
  %v892 = vmul.f32 %v884, %v673
  %v893 = vmul.f32 %v878, %v885
  %v894 = vadd.f32 %v892, %v893
  %v895 = vtanh.pop %v894
  %v896 = vmul.f32 %v891, %v895
  %v897 = vpack.c.bf16 %v896, %v896
  %v898 = vld [vmem:[%s4 + $0x80] sm:$0xf]
  %v899 = vld [vmem:[%s4 + $0x84] sm:$0xf]
  %v900 = vld [vmem:[%s4 + $0x88] sm:$0xf]
  %v901 = vld [vmem:[%s4 + $0x8c] sm:$0xf]
  %v902 = vld [vmem:[%s4 + $0x90] sm:$0xf]
  %v903 = vld [vmem:[%s4 + $0x94] sm:$0xf]
  %v904 = vld [vmem:[%s4 + $0x98] sm:$0xf]
  %v905 = vld [vmem:[%s4 + $0x9c] sm:$0xf]
  %v906 = vld [vmem:[%s4 + $0xa0] sm:$0xf]
  %v907 = vld [vmem:[%s4 + $0xa4] sm:$0xf]
  %v908 = vld [vmem:[%s4 + $0xa8] sm:$0xf]
  %v909 = vld [vmem:[%s4 + $0xac] sm:$0xf]
  %v910 = vld [vmem:[%s4 + $0xb0] sm:$0xf]
  %v911 = vld [vmem:[%s4 + $0xb4] sm:$0xf]
  %v912 = vld [vmem:[%s4 + $0xb8] sm:$0xf]
  %v913 = vld [vmem:[%s4 + $0xbc] sm:$0xf]
  %v930 = vunpack.c.l.b16 %v898
  %v931 = vunpack.c.l.b16 %v899
  %v932 = vunpack.c.l.b16 %v900
  %v933 = vunpack.c.l.b16 %v901
  %v934 = vunpack.c.l.b16 %v902
  %v935 = vunpack.c.l.b16 %v903
  %v936 = vunpack.c.l.b16 %v904
  %v937 = vunpack.c.l.b16 %v905
  %v938 = vunpack.c.l.b16 %v906
  %v939 = vunpack.c.l.b16 %v907
  %v940 = vunpack.c.l.b16 %v908
  %v941 = vunpack.c.l.b16 %v909
  %v942 = vunpack.c.l.b16 %v910
  %v943 = vunpack.c.l.b16 %v911
  %v944 = vunpack.c.l.b16 %v912
  %v945 = vunpack.c.l.b16 %v913
  %v946 = vpack.c.b16 %v931, %v930
  %v947 = vpack.c.b16 %v933, %v932
  %v948 = vpack.c.b16 %v935, %v934
  %v949 = vpack.c.b16 %v937, %v936
  %v950 = vpack.c.b16 %v939, %v938
  %v951 = vpack.c.b16 %v941, %v940
  %v952 = vpack.c.b16 %v943, %v942
  %v953 = vpack.c.b16 %v945, %v944
  %962 = vmatprep.subr.bf16.mxu0 0
  %963 = vmatpush1.bf16.msra.mxu0 %v953
  %964 = vmatprep.subr.bf16.mxu0 0
  %965 = vmatpush1.bf16.msra.mxu0 %v952
  %966 = vmatprep.subr.bf16.mxu0 0
  %967 = vmatpush1.bf16.msra.mxu0 %v951
  %968 = vmatprep.subr.bf16.mxu0 0
  %969 = vmatpush1.bf16.msra.mxu0 %v950
  %970 = vmatprep.subr.bf16.mxu0 0
  %971 = vmatpush1.bf16.msra.mxu0 %v949
  %972 = vmatprep.subr.bf16.mxu0 0
  %973 = vmatpush1.bf16.msra.mxu0 %v948
  %974 = vmatprep.subr.bf16.mxu0 0
  %975 = vmatpush1.bf16.msra.mxu0 %v947
  %976 = vmatprep.subr.bf16.mxu0 0
  %977 = vmatpush1.bf16.msra.mxu0 %v946
  %978 = vmatprep.subr.bf16.mxu0 0
  %979 = vmatpush2.bf16.msra.mxu0 0
  %980 = vmatprep.subr.bf16.mxu0 0
  %981 = vmatpush2.bf16.msra.mxu0 0
  %982 = vmatprep.subr.bf16.mxu0 0
  %983 = vmatpush2.bf16.msra.mxu0 0
  %984 = vmatprep.subr.bf16.mxu0 0
  %985 = vmatpush2.bf16.msra.mxu0 0
  %986 = vmatprep.subr.bf16.mxu0 0
  %987 = vmatpush2.bf16.msra.mxu0 0
  %988 = vmatprep.subr.bf16.mxu0 0
  %989 = vmatpush2.bf16.msra.mxu0 0
  %990 = vmatprep.subr.bf16.mxu0 0
  %991 = vmatpush2.bf16.msra.mxu0 0
  %992 = vmatprep.subr.bf16.mxu0 0
  %993 = vmatpush2.bf16.msra.mxu0 0
  %994 = vmatprep.mubr.bf16.mxu0 0
  %995 = vmatmul.mubr.bf16.gmra.mxu0 %v897
  %v996 = vpop.f32.mrf.mxu0
  %v997 = vadd.f32 0.0, %v996
  %v998 = vpop.f32.mrf.mxu0
  %v999 = vpop.f32.mrf.mxu0
  %v1000 = vpop.f32.mrf.mxu0
  %1001 = vdwg.mxu0
  %v1002 = vadd.f32 %v781, %v997
  %s1003 = scalar_lea.vmem %s0, 96
  %v1004 = vld [vmem:[%s1003] sm:$0xff]
  %v1005 = vld [vmem:[%s1003 + $0x8] sm:$0xff]
  %v1006 = vld [vmem:[%s1003 + $0x10] sm:$0xff]
  %v1007 = vld [vmem:[%s1003 + $0x18] sm:$0xff]
  %1008 = vmatprep.subr.bf16.mxu0 %v310
  %1009 = vmatpush1.bf16.msra.mxu0 %v309
  %1010 = vmatprep.subr.bf16.mxu0 %v306
  %1011 = vmatpush1.bf16.msra.mxu0 %v305
  %1012 = vmatprep.subr.bf16.mxu0 %v302
  %1013 = vmatpush1.bf16.msra.mxu0 %v301
  %1014 = vmatprep.subr.bf16.mxu0 %v298
  %1015 = vmatpush1.bf16.msra.mxu0 %v297
  %1016 = vmatprep.subr.bf16.mxu0 %v294
  %1017 = vmatpush1.bf16.msra.mxu0 %v293
  %1018 = vmatprep.subr.bf16.mxu0 %v290
  %1019 = vmatpush1.bf16.msra.mxu0 %v289
  %1020 = vmatprep.subr.bf16.mxu0 %v286
  %1021 = vmatpush1.bf16.msra.mxu0 %v285
  %1022 = vmatprep.subr.bf16.mxu0 %v282
  %1023 = vmatpush1.bf16.msra.mxu0 %v281
  %1024 = vmatprep.subr.bf16.mxu0 0
  %1025 = vmatpush2.bf16.msra.mxu0 0
  %1026 = vmatprep.subr.bf16.mxu0 0
  %1027 = vmatpush2.bf16.msra.mxu0 0
  %1028 = vmatprep.subr.bf16.mxu0 0
  %1029 = vmatpush2.bf16.msra.mxu0 0
  %1030 = vmatprep.subr.bf16.mxu0 0
  %1031 = vmatpush2.bf16.msra.mxu0 0
  %1032 = vmatprep.subr.bf16.mxu0 0
  %1033 = vmatpush2.bf16.msra.mxu0 0
  %1034 = vmatprep.subr.bf16.mxu0 0
  %1035 = vmatpush2.bf16.msra.mxu0 0
  %1036 = vmatprep.subr.bf16.mxu0 0
  %1037 = vmatpush2.bf16.msra.mxu0 0
  %1038 = vmatprep.subr.bf16.mxu0 0
  %1039 = vmatpush2.bf16.msra.mxu0 0
  %1040 = vmatprep.mubr.bf16.mxu0 0
  %1041 = vmatmul.mubr.bf16.gmra.mxu0 %v897
  %v1042 = vpop.f32.mrf.mxu0
  %v1043 = vadd.f32 0.0, %v1042
  %v1044 = vpop.f32.mrf.mxu0
  %v1045 = vadd.f32 0.0, %v1044
  %v1046 = vpop.f32.mrf.mxu0
  %v1047 = vpop.f32.mrf.mxu0
  %1048 = vdwg.mxu0
  %1049 = vmatprep.subr.bf16.mxu0 %v312
  %1050 = vmatpush1.bf16.msra.mxu0 %v311
  %1051 = vmatprep.subr.bf16.mxu0 %v308
  %1052 = vmatpush1.bf16.msra.mxu0 %v307
  %1053 = vmatprep.subr.bf16.mxu0 %v304
  %1054 = vmatpush1.bf16.msra.mxu0 %v303
  %1055 = vmatprep.subr.bf16.mxu0 %v300
  %1056 = vmatpush1.bf16.msra.mxu0 %v299
  %1057 = vmatprep.subr.bf16.mxu0 %v296
  %1058 = vmatpush1.bf16.msra.mxu0 %v295
  %1059 = vmatprep.subr.bf16.mxu0 %v292
  %1060 = vmatpush1.bf16.msra.mxu0 %v291
  %1061 = vmatprep.subr.bf16.mxu0 %v288
  %1062 = vmatpush1.bf16.msra.mxu0 %v287
  %1063 = vmatprep.subr.bf16.mxu0 %v284
  %1064 = vmatpush1.bf16.msra.mxu0 %v283
  %1065 = vmatprep.subr.bf16.mxu0 0
  %1066 = vmatpush2.bf16.msra.mxu0 0
  %1067 = vmatprep.subr.bf16.mxu0 0
  %1068 = vmatpush2.bf16.msra.mxu0 0
  %1069 = vmatprep.subr.bf16.mxu0 0
  %1070 = vmatpush2.bf16.msra.mxu0 0
  %1071 = vmatprep.subr.bf16.mxu0 0
  %1072 = vmatpush2.bf16.msra.mxu0 0
  %1073 = vmatprep.subr.bf16.mxu0 0
  %1074 = vmatpush2.bf16.msra.mxu0 0
  %1075 = vmatprep.subr.bf16.mxu0 0
  %1076 = vmatpush2.bf16.msra.mxu0 0
  %1077 = vmatprep.subr.bf16.mxu0 0
  %1078 = vmatpush2.bf16.msra.mxu0 0
  %1079 = vmatprep.subr.bf16.mxu0 0
  %1080 = vmatpush2.bf16.msra.mxu0 0
  %1081 = vmatprep.mubr.bf16.mxu0 0
  %1082 = vmatmul.mubr.bf16.gmra.mxu0 %v897
  %v1083 = vpop.f32.mrf.mxu0
  %v1084 = vadd.f32 0.0, %v1083
  %v1085 = vpop.f32.mrf.mxu0
  %v1086 = vadd.f32 0.0, %v1085
  %v1087 = vpop.f32.mrf.mxu0
  %v1088 = vpop.f32.mrf.mxu0
  %1089 = vdwg.mxu0
  %v1090 = vadd.f32 %v1004, %v1043
  %v1091 = vadd.f32 %v1005, %v1045
  %v1092 = vadd.f32 %v1006, %v1084
  %v1093 = vadd.f32 %v1007, %v1086
  %v1094 = vxor.u32 %v1090, 2147483648
  %v1095 = vmul.f32 %v1094, 1.442695
  %v1096 = vpow.pop %v1095
  %v1097 = vadd.f32 %v1096, 1.0
  %v1098 = vrcp.pop %v1097
  %v1099 = vmul.f32 1.0, %v1098
  %v1100 = vxor.u32 %v1091, 2147483648
  %v1101 = vmul.f32 %v1100, 1.442695
  %v1102 = vpow.pop %v1101
  %v1103 = vadd.f32 %v1102, 1.0
  %v1104 = vrcp.pop %v1103
  %v1105 = vmul.f32 1.0, %v1104
  %v1106 = vtanh.pop %v1092
  %v1107 = vxor.u32 %v1093, 2147483648
  %v1108 = vmul.f32 %v1107, 1.442695
  %v1109 = vpow.pop %v1108
  %v1110 = vadd.f32 %v1109, 1.0
  %v1111 = vrcp.pop %v1110
  %v1112 = vmul.f32 1.0, %v1111
  %v1113 = vmul.f32 %v1105, %v894
  %v1114 = vmul.f32 %v1099, %v1106
  %v1115 = vadd.f32 %v1113, %v1114
  %v1116 = vtanh.pop %v1115
  %v1117 = vmul.f32 %v1112, %v1116
  %v1118 = vpack.c.bf16 %v1117, %v1117
  %v1119 = vld [vmem:[%s4 + $0xc0] sm:$0xf]
  %v1120 = vld [vmem:[%s4 + $0xc4] sm:$0xf]
  %v1121 = vld [vmem:[%s4 + $0xc8] sm:$0xf]
  %v1122 = vld [vmem:[%s4 + $0xcc] sm:$0xf]
  %v1123 = vld [vmem:[%s4 + $0xd0] sm:$0xf]
  %v1124 = vld [vmem:[%s4 + $0xd4] sm:$0xf]
  %v1125 = vld [vmem:[%s4 + $0xd8] sm:$0xf]
  %v1126 = vld [vmem:[%s4 + $0xdc] sm:$0xf]
  %v1127 = vld [vmem:[%s4 + $0xe0] sm:$0xf]
  %v1128 = vld [vmem:[%s4 + $0xe4] sm:$0xf]
  %v1129 = vld [vmem:[%s4 + $0xe8] sm:$0xf]
  %v1130 = vld [vmem:[%s4 + $0xec] sm:$0xf]
  %v1131 = vld [vmem:[%s4 + $0xf0] sm:$0xf]
  %v1132 = vld [vmem:[%s4 + $0xf4] sm:$0xf]
  %v1133 = vld [vmem:[%s4 + $0xf8] sm:$0xf]
  %v1134 = vld [vmem:[%s4 + $0xfc] sm:$0xf]
  %v1151 = vunpack.c.l.b16 %v1119
  %v1152 = vunpack.c.l.b16 %v1120
  %v1153 = vunpack.c.l.b16 %v1121
  %v1154 = vunpack.c.l.b16 %v1122
  %v1155 = vunpack.c.l.b16 %v1123
  %v1156 = vunpack.c.l.b16 %v1124
  %v1157 = vunpack.c.l.b16 %v1125
  %v1158 = vunpack.c.l.b16 %v1126
  %v1159 = vunpack.c.l.b16 %v1127
  %v1160 = vunpack.c.l.b16 %v1128
  %v1161 = vunpack.c.l.b16 %v1129
  %v1162 = vunpack.c.l.b16 %v1130
  %v1163 = vunpack.c.l.b16 %v1131
  %v1164 = vunpack.c.l.b16 %v1132
  %v1165 = vunpack.c.l.b16 %v1133
  %v1166 = vunpack.c.l.b16 %v1134
  %v1167 = vpack.c.b16 %v1152, %v1151
  %v1168 = vpack.c.b16 %v1154, %v1153
  %v1169 = vpack.c.b16 %v1156, %v1155
  %v1170 = vpack.c.b16 %v1158, %v1157
  %v1171 = vpack.c.b16 %v1160, %v1159
  %v1172 = vpack.c.b16 %v1162, %v1161
  %v1173 = vpack.c.b16 %v1164, %v1163
  %v1174 = vpack.c.b16 %v1166, %v1165
  %1183 = vmatprep.subr.bf16.mxu0 0
  %1184 = vmatpush1.bf16.msra.mxu0 %v1174
  %1185 = vmatprep.subr.bf16.mxu0 0
  %1186 = vmatpush1.bf16.msra.mxu0 %v1173
  %1187 = vmatprep.subr.bf16.mxu0 0
  %1188 = vmatpush1.bf16.msra.mxu0 %v1172
  %1189 = vmatprep.subr.bf16.mxu0 0
  %1190 = vmatpush1.bf16.msra.mxu0 %v1171
  %1191 = vmatprep.subr.bf16.mxu0 0
  %1192 = vmatpush1.bf16.msra.mxu0 %v1170
  %1193 = vmatprep.subr.bf16.mxu0 0
  %1194 = vmatpush1.bf16.msra.mxu0 %v1169
  %1195 = vmatprep.subr.bf16.mxu0 0
  %1196 = vmatpush1.bf16.msra.mxu0 %v1168
  %1197 = vmatprep.subr.bf16.mxu0 0
  %1198 = vmatpush1.bf16.msra.mxu0 %v1167
  %1199 = vmatprep.subr.bf16.mxu0 0
  %1200 = vmatpush2.bf16.msra.mxu0 0
  %1201 = vmatprep.subr.bf16.mxu0 0
  %1202 = vmatpush2.bf16.msra.mxu0 0
  %1203 = vmatprep.subr.bf16.mxu0 0
  %1204 = vmatpush2.bf16.msra.mxu0 0
  %1205 = vmatprep.subr.bf16.mxu0 0
  %1206 = vmatpush2.bf16.msra.mxu0 0
  %1207 = vmatprep.subr.bf16.mxu0 0
  %1208 = vmatpush2.bf16.msra.mxu0 0
  %1209 = vmatprep.subr.bf16.mxu0 0
  %1210 = vmatpush2.bf16.msra.mxu0 0
  %1211 = vmatprep.subr.bf16.mxu0 0
  %1212 = vmatpush2.bf16.msra.mxu0 0
  %1213 = vmatprep.subr.bf16.mxu0 0
  %1214 = vmatpush2.bf16.msra.mxu0 0
  %1215 = vmatprep.mubr.bf16.mxu0 0
  %1216 = vmatmul.mubr.bf16.gmra.mxu0 %v1118
  %v1217 = vpop.f32.mrf.mxu0
  %v1218 = vadd.f32 0.0, %v1217
  %v1219 = vpop.f32.mrf.mxu0
  %v1220 = vpop.f32.mrf.mxu0
  %v1221 = vpop.f32.mrf.mxu0
  %1222 = vdwg.mxu0
  %v1223 = vadd.f32 %v1002, %v1218
  %s1224 = scalar_lea.vmem %s0, 128
  %v1225 = vld [vmem:[%s1224] sm:$0xff]
  %v1226 = vld [vmem:[%s1224 + $0x8] sm:$0xff]
  %v1227 = vld [vmem:[%s1224 + $0x10] sm:$0xff]
  %v1228 = vld [vmem:[%s1224 + $0x18] sm:$0xff]
  %1229 = vmatprep.subr.bf16.mxu0 %v310
  %1230 = vmatpush1.bf16.msra.mxu0 %v309
  %1231 = vmatprep.subr.bf16.mxu0 %v306
  %1232 = vmatpush1.bf16.msra.mxu0 %v305
  %1233 = vmatprep.subr.bf16.mxu0 %v302
  %1234 = vmatpush1.bf16.msra.mxu0 %v301
  %1235 = vmatprep.subr.bf16.mxu0 %v298
  %1236 = vmatpush1.bf16.msra.mxu0 %v297
  %1237 = vmatprep.subr.bf16.mxu0 %v294
  %1238 = vmatpush1.bf16.msra.mxu0 %v293
  %1239 = vmatprep.subr.bf16.mxu0 %v290
  %1240 = vmatpush1.bf16.msra.mxu0 %v289
  %1241 = vmatprep.subr.bf16.mxu0 %v286
  %1242 = vmatpush1.bf16.msra.mxu0 %v285
  %1243 = vmatprep.subr.bf16.mxu0 %v282
  %1244 = vmatpush1.bf16.msra.mxu0 %v281
  %1245 = vmatprep.subr.bf16.mxu0 0
  %1246 = vmatpush2.bf16.msra.mxu0 0
  %1247 = vmatprep.subr.bf16.mxu0 0
  %1248 = vmatpush2.bf16.msra.mxu0 0
  %1249 = vmatprep.subr.bf16.mxu0 0
  %1250 = vmatpush2.bf16.msra.mxu0 0
  %1251 = vmatprep.subr.bf16.mxu0 0
  %1252 = vmatpush2.bf16.msra.mxu0 0
  %1253 = vmatprep.subr.bf16.mxu0 0
  %1254 = vmatpush2.bf16.msra.mxu0 0
  %1255 = vmatprep.subr.bf16.mxu0 0
  %1256 = vmatpush2.bf16.msra.mxu0 0
  %1257 = vmatprep.subr.bf16.mxu0 0
  %1258 = vmatpush2.bf16.msra.mxu0 0
  %1259 = vmatprep.subr.bf16.mxu0 0
  %1260 = vmatpush2.bf16.msra.mxu0 0
  %1261 = vmatprep.mubr.bf16.mxu0 0
  %1262 = vmatmul.mubr.bf16.gmra.mxu0 %v1118
  %v1263 = vpop.f32.mrf.mxu0
  %v1264 = vadd.f32 0.0, %v1263
  %v1265 = vpop.f32.mrf.mxu0
  %v1266 = vadd.f32 0.0, %v1265
  %v1267 = vpop.f32.mrf.mxu0
  %v1268 = vpop.f32.mrf.mxu0
  %1269 = vdwg.mxu0
  %1270 = vmatprep.subr.bf16.mxu0 %v312
  %1271 = vmatpush1.bf16.msra.mxu0 %v311
  %1272 = vmatprep.subr.bf16.mxu0 %v308
  %1273 = vmatpush1.bf16.msra.mxu0 %v307
  %1274 = vmatprep.subr.bf16.mxu0 %v304
  %1275 = vmatpush1.bf16.msra.mxu0 %v303
  %1276 = vmatprep.subr.bf16.mxu0 %v300
  %1277 = vmatpush1.bf16.msra.mxu0 %v299
  %1278 = vmatprep.subr.bf16.mxu0 %v296
  %1279 = vmatpush1.bf16.msra.mxu0 %v295
  %1280 = vmatprep.subr.bf16.mxu0 %v292
  %1281 = vmatpush1.bf16.msra.mxu0 %v291
  %1282 = vmatprep.subr.bf16.mxu0 %v288
  %1283 = vmatpush1.bf16.msra.mxu0 %v287
  %1284 = vmatprep.subr.bf16.mxu0 %v284
  %1285 = vmatpush1.bf16.msra.mxu0 %v283
  %1286 = vmatprep.subr.bf16.mxu0 0
  %1287 = vmatpush2.bf16.msra.mxu0 0
  %1288 = vmatprep.subr.bf16.mxu0 0
  %1289 = vmatpush2.bf16.msra.mxu0 0
  %1290 = vmatprep.subr.bf16.mxu0 0
  %1291 = vmatpush2.bf16.msra.mxu0 0
  %1292 = vmatprep.subr.bf16.mxu0 0
  %1293 = vmatpush2.bf16.msra.mxu0 0
  %1294 = vmatprep.subr.bf16.mxu0 0
  %1295 = vmatpush2.bf16.msra.mxu0 0
  %1296 = vmatprep.subr.bf16.mxu0 0
  %1297 = vmatpush2.bf16.msra.mxu0 0
  %1298 = vmatprep.subr.bf16.mxu0 0
  %1299 = vmatpush2.bf16.msra.mxu0 0
  %1300 = vmatprep.subr.bf16.mxu0 0
  %1301 = vmatpush2.bf16.msra.mxu0 0
  %1302 = vmatprep.mubr.bf16.mxu0 0
  %1303 = vmatmul.mubr.bf16.gmra.mxu0 %v1118
  %v1304 = vpop.f32.mrf.mxu0
  %v1305 = vadd.f32 0.0, %v1304
  %v1306 = vpop.f32.mrf.mxu0
  %v1307 = vadd.f32 0.0, %v1306
  %v1308 = vpop.f32.mrf.mxu0
  %v1309 = vpop.f32.mrf.mxu0
  %1310 = vdwg.mxu0
  %v1311 = vadd.f32 %v1225, %v1264
  %v1312 = vadd.f32 %v1226, %v1266
  %v1313 = vadd.f32 %v1227, %v1305
  %v1314 = vadd.f32 %v1228, %v1307
  %v1315 = vxor.u32 %v1311, 2147483648
  %v1316 = vmul.f32 %v1315, 1.442695
  %v1317 = vpow.pop %v1316
  %v1318 = vadd.f32 %v1317, 1.0
  %v1319 = vrcp.pop %v1318
  %v1320 = vmul.f32 1.0, %v1319
  %v1321 = vxor.u32 %v1312, 2147483648
  %v1322 = vmul.f32 %v1321, 1.442695
  %v1323 = vpow.pop %v1322
  %v1324 = vadd.f32 %v1323, 1.0
  %v1325 = vrcp.pop %v1324
  %v1326 = vmul.f32 1.0, %v1325
  %v1327 = vtanh.pop %v1313
  %v1328 = vxor.u32 %v1314, 2147483648
  %v1329 = vmul.f32 %v1328, 1.442695
  %v1330 = vpow.pop %v1329
  %v1331 = vadd.f32 %v1330, 1.0
  %v1332 = vrcp.pop %v1331
  %v1333 = vmul.f32 1.0, %v1332
  %v1334 = vmul.f32 %v1326, %v1115
  %v1335 = vmul.f32 %v1320, %v1327
  %v1336 = vadd.f32 %v1334, %v1335
  %v1337 = vtanh.pop %v1336
  %v1338 = vmul.f32 %v1333, %v1337
  %v1339 = vpack.c.bf16 %v1338, %v1338
  %v1340 = vld [vmem:[%s4 + $0x100] sm:$0xf]
  %v1341 = vld [vmem:[%s4 + $0x104] sm:$0xf]
  %v1342 = vld [vmem:[%s4 + $0x108] sm:$0xf]
  %v1343 = vld [vmem:[%s4 + $0x10c] sm:$0xf]
  %v1344 = vld [vmem:[%s4 + $0x110] sm:$0xf]
  %v1345 = vld [vmem:[%s4 + $0x114] sm:$0xf]
  %v1346 = vld [vmem:[%s4 + $0x118] sm:$0xf]
  %v1347 = vld [vmem:[%s4 + $0x11c] sm:$0xf]
  %v1348 = vld [vmem:[%s4 + $0x120] sm:$0xf]
  %v1349 = vld [vmem:[%s4 + $0x124] sm:$0xf]
  %v1350 = vld [vmem:[%s4 + $0x128] sm:$0xf]
  %v1351 = vld [vmem:[%s4 + $0x12c] sm:$0xf]
  %v1352 = vld [vmem:[%s4 + $0x130] sm:$0xf]
  %v1353 = vld [vmem:[%s4 + $0x134] sm:$0xf]
  %v1354 = vld [vmem:[%s4 + $0x138] sm:$0xf]
  %v1355 = vld [vmem:[%s4 + $0x13c] sm:$0xf]
  %v1372 = vunpack.c.l.b16 %v1340
  %v1373 = vunpack.c.l.b16 %v1341
  %v1374 = vunpack.c.l.b16 %v1342
  %v1375 = vunpack.c.l.b16 %v1343
  %v1376 = vunpack.c.l.b16 %v1344
  %v1377 = vunpack.c.l.b16 %v1345
  %v1378 = vunpack.c.l.b16 %v1346
  %v1379 = vunpack.c.l.b16 %v1347
  %v1380 = vunpack.c.l.b16 %v1348
  %v1381 = vunpack.c.l.b16 %v1349
  %v1382 = vunpack.c.l.b16 %v1350
  %v1383 = vunpack.c.l.b16 %v1351
  %v1384 = vunpack.c.l.b16 %v1352
  %v1385 = vunpack.c.l.b16 %v1353
  %v1386 = vunpack.c.l.b16 %v1354
  %v1387 = vunpack.c.l.b16 %v1355
  %v1388 = vpack.c.b16 %v1373, %v1372
  %v1389 = vpack.c.b16 %v1375, %v1374
  %v1390 = vpack.c.b16 %v1377, %v1376
  %v1391 = vpack.c.b16 %v1379, %v1378
  %v1392 = vpack.c.b16 %v1381, %v1380
  %v1393 = vpack.c.b16 %v1383, %v1382
  %v1394 = vpack.c.b16 %v1385, %v1384
  %v1395 = vpack.c.b16 %v1387, %v1386
  %1404 = vmatprep.subr.bf16.mxu0 0
  %1405 = vmatpush1.bf16.msra.mxu0 %v1395
  %1406 = vmatprep.subr.bf16.mxu0 0
  %1407 = vmatpush1.bf16.msra.mxu0 %v1394
  %1408 = vmatprep.subr.bf16.mxu0 0
  %1409 = vmatpush1.bf16.msra.mxu0 %v1393
  %1410 = vmatprep.subr.bf16.mxu0 0
  %1411 = vmatpush1.bf16.msra.mxu0 %v1392
  %1412 = vmatprep.subr.bf16.mxu0 0
  %1413 = vmatpush1.bf16.msra.mxu0 %v1391
  %1414 = vmatprep.subr.bf16.mxu0 0
  %1415 = vmatpush1.bf16.msra.mxu0 %v1390
  %1416 = vmatprep.subr.bf16.mxu0 0
  %1417 = vmatpush1.bf16.msra.mxu0 %v1389
  %1418 = vmatprep.subr.bf16.mxu0 0
  %1419 = vmatpush1.bf16.msra.mxu0 %v1388
  %1420 = vmatprep.subr.bf16.mxu0 0
  %1421 = vmatpush2.bf16.msra.mxu0 0
  %1422 = vmatprep.subr.bf16.mxu0 0
  %1423 = vmatpush2.bf16.msra.mxu0 0
  %1424 = vmatprep.subr.bf16.mxu0 0
  %1425 = vmatpush2.bf16.msra.mxu0 0
  %1426 = vmatprep.subr.bf16.mxu0 0
  %1427 = vmatpush2.bf16.msra.mxu0 0
  %1428 = vmatprep.subr.bf16.mxu0 0
  %1429 = vmatpush2.bf16.msra.mxu0 0
  %1430 = vmatprep.subr.bf16.mxu0 0
  %1431 = vmatpush2.bf16.msra.mxu0 0
  %1432 = vmatprep.subr.bf16.mxu0 0
  %1433 = vmatpush2.bf16.msra.mxu0 0
  %1434 = vmatprep.subr.bf16.mxu0 0
  %1435 = vmatpush2.bf16.msra.mxu0 0
  %1436 = vmatprep.mubr.bf16.mxu0 0
  %1437 = vmatmul.mubr.bf16.gmra.mxu0 %v1339
  %v1438 = vpop.f32.mrf.mxu0
  %v1439 = vadd.f32 0.0, %v1438
  %v1440 = vpop.f32.mrf.mxu0
  %v1441 = vpop.f32.mrf.mxu0
  %v1442 = vpop.f32.mrf.mxu0
  %1443 = vdwg.mxu0
  %v1444 = vadd.f32 %v1223, %v1439
  %s1445 = scalar_lea.vmem %s0, 160
  %v1446 = vld [vmem:[%s1445] sm:$0xff]
  %v1447 = vld [vmem:[%s1445 + $0x8] sm:$0xff]
  %v1448 = vld [vmem:[%s1445 + $0x10] sm:$0xff]
  %v1449 = vld [vmem:[%s1445 + $0x18] sm:$0xff]
  %1450 = vmatprep.subr.bf16.mxu0 %v310
  %1451 = vmatpush1.bf16.msra.mxu0 %v309
  %1452 = vmatprep.subr.bf16.mxu0 %v306
  %1453 = vmatpush1.bf16.msra.mxu0 %v305
  %1454 = vmatprep.subr.bf16.mxu0 %v302
  %1455 = vmatpush1.bf16.msra.mxu0 %v301
  %1456 = vmatprep.subr.bf16.mxu0 %v298
  %1457 = vmatpush1.bf16.msra.mxu0 %v297
  %1458 = vmatprep.subr.bf16.mxu0 %v294
  %1459 = vmatpush1.bf16.msra.mxu0 %v293
  %1460 = vmatprep.subr.bf16.mxu0 %v290
  %1461 = vmatpush1.bf16.msra.mxu0 %v289
  %1462 = vmatprep.subr.bf16.mxu0 %v286
  %1463 = vmatpush1.bf16.msra.mxu0 %v285
  %1464 = vmatprep.subr.bf16.mxu0 %v282
  %1465 = vmatpush1.bf16.msra.mxu0 %v281
  %1466 = vmatprep.subr.bf16.mxu0 0
  %1467 = vmatpush2.bf16.msra.mxu0 0
  %1468 = vmatprep.subr.bf16.mxu0 0
  %1469 = vmatpush2.bf16.msra.mxu0 0
  %1470 = vmatprep.subr.bf16.mxu0 0
  %1471 = vmatpush2.bf16.msra.mxu0 0
  %1472 = vmatprep.subr.bf16.mxu0 0
  %1473 = vmatpush2.bf16.msra.mxu0 0
  %1474 = vmatprep.subr.bf16.mxu0 0
  %1475 = vmatpush2.bf16.msra.mxu0 0
  %1476 = vmatprep.subr.bf16.mxu0 0
  %1477 = vmatpush2.bf16.msra.mxu0 0
  %1478 = vmatprep.subr.bf16.mxu0 0
  %1479 = vmatpush2.bf16.msra.mxu0 0
  %1480 = vmatprep.subr.bf16.mxu0 0
  %1481 = vmatpush2.bf16.msra.mxu0 0
  %1482 = vmatprep.mubr.bf16.mxu0 0
  %1483 = vmatmul.mubr.bf16.gmra.mxu0 %v1339
  %v1484 = vpop.f32.mrf.mxu0
  %v1485 = vadd.f32 0.0, %v1484
  %v1486 = vpop.f32.mrf.mxu0
  %v1487 = vadd.f32 0.0, %v1486
  %v1488 = vpop.f32.mrf.mxu0
  %v1489 = vpop.f32.mrf.mxu0
  %1490 = vdwg.mxu0
  %1491 = vmatprep.subr.bf16.mxu0 %v312
  %1492 = vmatpush1.bf16.msra.mxu0 %v311
  %1493 = vmatprep.subr.bf16.mxu0 %v308
  %1494 = vmatpush1.bf16.msra.mxu0 %v307
  %1495 = vmatprep.subr.bf16.mxu0 %v304
  %1496 = vmatpush1.bf16.msra.mxu0 %v303
  %1497 = vmatprep.subr.bf16.mxu0 %v300
  %1498 = vmatpush1.bf16.msra.mxu0 %v299
  %1499 = vmatprep.subr.bf16.mxu0 %v296
  %1500 = vmatpush1.bf16.msra.mxu0 %v295
  %1501 = vmatprep.subr.bf16.mxu0 %v292
  %1502 = vmatpush1.bf16.msra.mxu0 %v291
  %1503 = vmatprep.subr.bf16.mxu0 %v288
  %1504 = vmatpush1.bf16.msra.mxu0 %v287
  %1505 = vmatprep.subr.bf16.mxu0 %v284
  %1506 = vmatpush1.bf16.msra.mxu0 %v283
  %1507 = vmatprep.subr.bf16.mxu0 0
  %1508 = vmatpush2.bf16.msra.mxu0 0
  %1509 = vmatprep.subr.bf16.mxu0 0
  %1510 = vmatpush2.bf16.msra.mxu0 0
  %1511 = vmatprep.subr.bf16.mxu0 0
  %1512 = vmatpush2.bf16.msra.mxu0 0
  %1513 = vmatprep.subr.bf16.mxu0 0
  %1514 = vmatpush2.bf16.msra.mxu0 0
  %1515 = vmatprep.subr.bf16.mxu0 0
  %1516 = vmatpush2.bf16.msra.mxu0 0
  %1517 = vmatprep.subr.bf16.mxu0 0
  %1518 = vmatpush2.bf16.msra.mxu0 0
  %1519 = vmatprep.subr.bf16.mxu0 0
  %1520 = vmatpush2.bf16.msra.mxu0 0
  %1521 = vmatprep.subr.bf16.mxu0 0
  %1522 = vmatpush2.bf16.msra.mxu0 0
  %1523 = vmatprep.mubr.bf16.mxu0 0
  %1524 = vmatmul.mubr.bf16.gmra.mxu0 %v1339
  %v1525 = vpop.f32.mrf.mxu0
  %v1526 = vadd.f32 0.0, %v1525
  %v1527 = vpop.f32.mrf.mxu0
  %v1528 = vadd.f32 0.0, %v1527
  %v1529 = vpop.f32.mrf.mxu0
  %v1530 = vpop.f32.mrf.mxu0
  %1531 = vdwg.mxu0
  %v1532 = vadd.f32 %v1446, %v1485
  %v1533 = vadd.f32 %v1447, %v1487
  %v1534 = vadd.f32 %v1448, %v1526
  %v1535 = vadd.f32 %v1449, %v1528
  %v1536 = vxor.u32 %v1532, 2147483648
  %v1537 = vmul.f32 %v1536, 1.442695
  %v1538 = vpow.pop %v1537
  %v1539 = vadd.f32 %v1538, 1.0
  %v1540 = vrcp.pop %v1539
  %v1541 = vmul.f32 1.0, %v1540
  %v1542 = vxor.u32 %v1533, 2147483648
  %v1543 = vmul.f32 %v1542, 1.442695
  %v1544 = vpow.pop %v1543
  %v1545 = vadd.f32 %v1544, 1.0
  %v1546 = vrcp.pop %v1545
  %v1547 = vmul.f32 1.0, %v1546
  %v1548 = vtanh.pop %v1534
  %v1549 = vxor.u32 %v1535, 2147483648
  %v1550 = vmul.f32 %v1549, 1.442695
  %v1551 = vpow.pop %v1550
  %v1552 = vadd.f32 %v1551, 1.0
  %v1553 = vrcp.pop %v1552
  %v1554 = vmul.f32 1.0, %v1553
  %v1555 = vmul.f32 %v1547, %v1336
  %v1556 = vmul.f32 %v1541, %v1548
  %v1557 = vadd.f32 %v1555, %v1556
  %v1558 = vtanh.pop %v1557
  %v1559 = vmul.f32 %v1554, %v1558
  %v1560 = vpack.c.bf16 %v1559, %v1559
  %v1561 = vld [vmem:[%s4 + $0x140] sm:$0xf]
  %v1562 = vld [vmem:[%s4 + $0x144] sm:$0xf]
  %v1563 = vld [vmem:[%s4 + $0x148] sm:$0xf]
  %v1564 = vld [vmem:[%s4 + $0x14c] sm:$0xf]
  %v1565 = vld [vmem:[%s4 + $0x150] sm:$0xf]
  %v1566 = vld [vmem:[%s4 + $0x154] sm:$0xf]
  %v1567 = vld [vmem:[%s4 + $0x158] sm:$0xf]
  %v1568 = vld [vmem:[%s4 + $0x15c] sm:$0xf]
  %v1569 = vld [vmem:[%s4 + $0x160] sm:$0xf]
  %v1570 = vld [vmem:[%s4 + $0x164] sm:$0xf]
  %v1571 = vld [vmem:[%s4 + $0x168] sm:$0xf]
  %v1572 = vld [vmem:[%s4 + $0x16c] sm:$0xf]
  %v1573 = vld [vmem:[%s4 + $0x170] sm:$0xf]
  %v1574 = vld [vmem:[%s4 + $0x174] sm:$0xf]
  %v1575 = vld [vmem:[%s4 + $0x178] sm:$0xf]
  %v1576 = vld [vmem:[%s4 + $0x17c] sm:$0xf]
  %v1593 = vunpack.c.l.b16 %v1561
  %v1594 = vunpack.c.l.b16 %v1562
  %v1595 = vunpack.c.l.b16 %v1563
  %v1596 = vunpack.c.l.b16 %v1564
  %v1597 = vunpack.c.l.b16 %v1565
  %v1598 = vunpack.c.l.b16 %v1566
  %v1599 = vunpack.c.l.b16 %v1567
  %v1600 = vunpack.c.l.b16 %v1568
  %v1601 = vunpack.c.l.b16 %v1569
  %v1602 = vunpack.c.l.b16 %v1570
  %v1603 = vunpack.c.l.b16 %v1571
  %v1604 = vunpack.c.l.b16 %v1572
  %v1605 = vunpack.c.l.b16 %v1573
  %v1606 = vunpack.c.l.b16 %v1574
  %v1607 = vunpack.c.l.b16 %v1575
  %v1608 = vunpack.c.l.b16 %v1576
  %v1609 = vpack.c.b16 %v1594, %v1593
  %v1610 = vpack.c.b16 %v1596, %v1595
  %v1611 = vpack.c.b16 %v1598, %v1597
  %v1612 = vpack.c.b16 %v1600, %v1599
  %v1613 = vpack.c.b16 %v1602, %v1601
  %v1614 = vpack.c.b16 %v1604, %v1603
  %v1615 = vpack.c.b16 %v1606, %v1605
  %v1616 = vpack.c.b16 %v1608, %v1607
  %1625 = vmatprep.subr.bf16.mxu0 0
  %1626 = vmatpush1.bf16.msra.mxu0 %v1616
  %1627 = vmatprep.subr.bf16.mxu0 0
  %1628 = vmatpush1.bf16.msra.mxu0 %v1615
  %1629 = vmatprep.subr.bf16.mxu0 0
  %1630 = vmatpush1.bf16.msra.mxu0 %v1614
  %1631 = vmatprep.subr.bf16.mxu0 0
  %1632 = vmatpush1.bf16.msra.mxu0 %v1613
  %1633 = vmatprep.subr.bf16.mxu0 0
  %1634 = vmatpush1.bf16.msra.mxu0 %v1612
  %1635 = vmatprep.subr.bf16.mxu0 0
  %1636 = vmatpush1.bf16.msra.mxu0 %v1611
  %1637 = vmatprep.subr.bf16.mxu0 0
  %1638 = vmatpush1.bf16.msra.mxu0 %v1610
  %1639 = vmatprep.subr.bf16.mxu0 0
  %1640 = vmatpush1.bf16.msra.mxu0 %v1609
  %1641 = vmatprep.subr.bf16.mxu0 0
  %1642 = vmatpush2.bf16.msra.mxu0 0
  %1643 = vmatprep.subr.bf16.mxu0 0
  %1644 = vmatpush2.bf16.msra.mxu0 0
  %1645 = vmatprep.subr.bf16.mxu0 0
  %1646 = vmatpush2.bf16.msra.mxu0 0
  %1647 = vmatprep.subr.bf16.mxu0 0
  %1648 = vmatpush2.bf16.msra.mxu0 0
  %1649 = vmatprep.subr.bf16.mxu0 0
  %1650 = vmatpush2.bf16.msra.mxu0 0
  %1651 = vmatprep.subr.bf16.mxu0 0
  %1652 = vmatpush2.bf16.msra.mxu0 0
  %1653 = vmatprep.subr.bf16.mxu0 0
  %1654 = vmatpush2.bf16.msra.mxu0 0
  %1655 = vmatprep.subr.bf16.mxu0 0
  %1656 = vmatpush2.bf16.msra.mxu0 0
  %1657 = vmatprep.mubr.bf16.mxu0 0
  %1658 = vmatmul.mubr.bf16.gmra.mxu0 %v1560
  %v1659 = vpop.f32.mrf.mxu0
  %v1660 = vadd.f32 0.0, %v1659
  %v1661 = vpop.f32.mrf.mxu0
  %v1662 = vpop.f32.mrf.mxu0
  %v1663 = vpop.f32.mrf.mxu0
  %1664 = vdwg.mxu0
  %v1665 = vadd.f32 %v1444, %v1660
  %s1666 = scalar_lea.vmem %s0, 192
  %v1667 = vld [vmem:[%s1666] sm:$0xff]
  %v1668 = vld [vmem:[%s1666 + $0x8] sm:$0xff]
  %v1669 = vld [vmem:[%s1666 + $0x10] sm:$0xff]
  %v1670 = vld [vmem:[%s1666 + $0x18] sm:$0xff]
  %1671 = vmatprep.subr.bf16.mxu0 %v310
  %1672 = vmatpush1.bf16.msra.mxu0 %v309
  %1673 = vmatprep.subr.bf16.mxu0 %v306
  %1674 = vmatpush1.bf16.msra.mxu0 %v305
  %1675 = vmatprep.subr.bf16.mxu0 %v302
  %1676 = vmatpush1.bf16.msra.mxu0 %v301
  %1677 = vmatprep.subr.bf16.mxu0 %v298
  %1678 = vmatpush1.bf16.msra.mxu0 %v297
  %1679 = vmatprep.subr.bf16.mxu0 %v294
  %1680 = vmatpush1.bf16.msra.mxu0 %v293
  %1681 = vmatprep.subr.bf16.mxu0 %v290
  %1682 = vmatpush1.bf16.msra.mxu0 %v289
  %1683 = vmatprep.subr.bf16.mxu0 %v286
  %1684 = vmatpush1.bf16.msra.mxu0 %v285
  %1685 = vmatprep.subr.bf16.mxu0 %v282
  %1686 = vmatpush1.bf16.msra.mxu0 %v281
  %1687 = vmatprep.subr.bf16.mxu0 0
  %1688 = vmatpush2.bf16.msra.mxu0 0
  %1689 = vmatprep.subr.bf16.mxu0 0
  %1690 = vmatpush2.bf16.msra.mxu0 0
  %1691 = vmatprep.subr.bf16.mxu0 0
  %1692 = vmatpush2.bf16.msra.mxu0 0
  %1693 = vmatprep.subr.bf16.mxu0 0
  %1694 = vmatpush2.bf16.msra.mxu0 0
  %1695 = vmatprep.subr.bf16.mxu0 0
  %1696 = vmatpush2.bf16.msra.mxu0 0
  %1697 = vmatprep.subr.bf16.mxu0 0
  %1698 = vmatpush2.bf16.msra.mxu0 0
  %1699 = vmatprep.subr.bf16.mxu0 0
  %1700 = vmatpush2.bf16.msra.mxu0 0
  %1701 = vmatprep.subr.bf16.mxu0 0
  %1702 = vmatpush2.bf16.msra.mxu0 0
  %1703 = vmatprep.mubr.bf16.mxu0 0
  %1704 = vmatmul.mubr.bf16.gmra.mxu0 %v1560
  %v1705 = vpop.f32.mrf.mxu0
  %v1706 = vadd.f32 0.0, %v1705
  %v1707 = vpop.f32.mrf.mxu0
  %v1708 = vadd.f32 0.0, %v1707
  %v1709 = vpop.f32.mrf.mxu0
  %v1710 = vpop.f32.mrf.mxu0
  %1711 = vdwg.mxu0
  %1712 = vmatprep.subr.bf16.mxu0 %v312
  %1713 = vmatpush1.bf16.msra.mxu0 %v311
  %1714 = vmatprep.subr.bf16.mxu0 %v308
  %1715 = vmatpush1.bf16.msra.mxu0 %v307
  %1716 = vmatprep.subr.bf16.mxu0 %v304
  %1717 = vmatpush1.bf16.msra.mxu0 %v303
  %1718 = vmatprep.subr.bf16.mxu0 %v300
  %1719 = vmatpush1.bf16.msra.mxu0 %v299
  %1720 = vmatprep.subr.bf16.mxu0 %v296
  %1721 = vmatpush1.bf16.msra.mxu0 %v295
  %1722 = vmatprep.subr.bf16.mxu0 %v292
  %1723 = vmatpush1.bf16.msra.mxu0 %v291
  %1724 = vmatprep.subr.bf16.mxu0 %v288
  %1725 = vmatpush1.bf16.msra.mxu0 %v287
  %1726 = vmatprep.subr.bf16.mxu0 %v284
  %1727 = vmatpush1.bf16.msra.mxu0 %v283
  %1728 = vmatprep.subr.bf16.mxu0 0
  %1729 = vmatpush2.bf16.msra.mxu0 0
  %1730 = vmatprep.subr.bf16.mxu0 0
  %1731 = vmatpush2.bf16.msra.mxu0 0
  %1732 = vmatprep.subr.bf16.mxu0 0
  %1733 = vmatpush2.bf16.msra.mxu0 0
  %1734 = vmatprep.subr.bf16.mxu0 0
  %1735 = vmatpush2.bf16.msra.mxu0 0
  %1736 = vmatprep.subr.bf16.mxu0 0
  %1737 = vmatpush2.bf16.msra.mxu0 0
  %1738 = vmatprep.subr.bf16.mxu0 0
  %1739 = vmatpush2.bf16.msra.mxu0 0
  %1740 = vmatprep.subr.bf16.mxu0 0
  %1741 = vmatpush2.bf16.msra.mxu0 0
  %1742 = vmatprep.subr.bf16.mxu0 0
  %1743 = vmatpush2.bf16.msra.mxu0 0
  %1744 = vmatprep.mubr.bf16.mxu0 0
  %1745 = vmatmul.mubr.bf16.gmra.mxu0 %v1560
  %v1746 = vpop.f32.mrf.mxu0
  %v1747 = vadd.f32 0.0, %v1746
  %v1748 = vpop.f32.mrf.mxu0
  %v1749 = vadd.f32 0.0, %v1748
  %v1750 = vpop.f32.mrf.mxu0
  %v1751 = vpop.f32.mrf.mxu0
  %1752 = vdwg.mxu0
  %v1753 = vadd.f32 %v1667, %v1706
  %v1754 = vadd.f32 %v1668, %v1708
  %v1755 = vadd.f32 %v1669, %v1747
  %v1756 = vadd.f32 %v1670, %v1749
  %v1757 = vxor.u32 %v1753, 2147483648
  %v1758 = vmul.f32 %v1757, 1.442695
  %v1759 = vpow.pop %v1758
  %v1760 = vadd.f32 %v1759, 1.0
  %v1761 = vrcp.pop %v1760
  %v1762 = vmul.f32 1.0, %v1761
  %v1763 = vxor.u32 %v1754, 2147483648
  %v1764 = vmul.f32 %v1763, 1.442695
  %v1765 = vpow.pop %v1764
  %v1766 = vadd.f32 %v1765, 1.0
  %v1767 = vrcp.pop %v1766
  %v1768 = vmul.f32 1.0, %v1767
  %v1769 = vtanh.pop %v1755
  %v1770 = vxor.u32 %v1756, 2147483648
  %v1771 = vmul.f32 %v1770, 1.442695
  %v1772 = vpow.pop %v1771
  %v1773 = vadd.f32 %v1772, 1.0
  %v1774 = vrcp.pop %v1773
  %v1775 = vmul.f32 1.0, %v1774
  %v1776 = vmul.f32 %v1768, %v1557
  %v1777 = vmul.f32 %v1762, %v1769
  %v1778 = vadd.f32 %v1776, %v1777
  %v1779 = vtanh.pop %v1778
  %v1780 = vmul.f32 %v1775, %v1779
  %v1781 = vpack.c.bf16 %v1780, %v1780
  %v1782 = vld [vmem:[%s4 + $0x180] sm:$0xf]
  %v1783 = vld [vmem:[%s4 + $0x184] sm:$0xf]
  %v1784 = vld [vmem:[%s4 + $0x188] sm:$0xf]
  %v1785 = vld [vmem:[%s4 + $0x18c] sm:$0xf]
  %v1786 = vld [vmem:[%s4 + $0x190] sm:$0xf]
  %v1787 = vld [vmem:[%s4 + $0x194] sm:$0xf]
  %v1788 = vld [vmem:[%s4 + $0x198] sm:$0xf]
  %v1789 = vld [vmem:[%s4 + $0x19c] sm:$0xf]
  %v1790 = vld [vmem:[%s4 + $0x1a0] sm:$0xf]
  %v1791 = vld [vmem:[%s4 + $0x1a4] sm:$0xf]
  %v1792 = vld [vmem:[%s4 + $0x1a8] sm:$0xf]
  %v1793 = vld [vmem:[%s4 + $0x1ac] sm:$0xf]
  %v1794 = vld [vmem:[%s4 + $0x1b0] sm:$0xf]
  %v1795 = vld [vmem:[%s4 + $0x1b4] sm:$0xf]
  %v1796 = vld [vmem:[%s4 + $0x1b8] sm:$0xf]
  %v1797 = vld [vmem:[%s4 + $0x1bc] sm:$0xf]
  %v1814 = vunpack.c.l.b16 %v1782
  %v1815 = vunpack.c.l.b16 %v1783
  %v1816 = vunpack.c.l.b16 %v1784
  %v1817 = vunpack.c.l.b16 %v1785
  %v1818 = vunpack.c.l.b16 %v1786
  %v1819 = vunpack.c.l.b16 %v1787
  %v1820 = vunpack.c.l.b16 %v1788
  %v1821 = vunpack.c.l.b16 %v1789
  %v1822 = vunpack.c.l.b16 %v1790
  %v1823 = vunpack.c.l.b16 %v1791
  %v1824 = vunpack.c.l.b16 %v1792
  %v1825 = vunpack.c.l.b16 %v1793
  %v1826 = vunpack.c.l.b16 %v1794
  %v1827 = vunpack.c.l.b16 %v1795
  %v1828 = vunpack.c.l.b16 %v1796
  %v1829 = vunpack.c.l.b16 %v1797
  %v1830 = vpack.c.b16 %v1815, %v1814
  %v1831 = vpack.c.b16 %v1817, %v1816
  %v1832 = vpack.c.b16 %v1819, %v1818
  %v1833 = vpack.c.b16 %v1821, %v1820
  %v1834 = vpack.c.b16 %v1823, %v1822
  %v1835 = vpack.c.b16 %v1825, %v1824
  %v1836 = vpack.c.b16 %v1827, %v1826
  %v1837 = vpack.c.b16 %v1829, %v1828
  %1846 = vmatprep.subr.bf16.mxu0 0
  %1847 = vmatpush1.bf16.msra.mxu0 %v1837
  %1848 = vmatprep.subr.bf16.mxu0 0
  %1849 = vmatpush1.bf16.msra.mxu0 %v1836
  %1850 = vmatprep.subr.bf16.mxu0 0
  %1851 = vmatpush1.bf16.msra.mxu0 %v1835
  %1852 = vmatprep.subr.bf16.mxu0 0
  %1853 = vmatpush1.bf16.msra.mxu0 %v1834
  %1854 = vmatprep.subr.bf16.mxu0 0
  %1855 = vmatpush1.bf16.msra.mxu0 %v1833
  %1856 = vmatprep.subr.bf16.mxu0 0
  %1857 = vmatpush1.bf16.msra.mxu0 %v1832
  %1858 = vmatprep.subr.bf16.mxu0 0
  %1859 = vmatpush1.bf16.msra.mxu0 %v1831
  %1860 = vmatprep.subr.bf16.mxu0 0
  %1861 = vmatpush1.bf16.msra.mxu0 %v1830
  %1862 = vmatprep.subr.bf16.mxu0 0
  %1863 = vmatpush2.bf16.msra.mxu0 0
  %1864 = vmatprep.subr.bf16.mxu0 0
  %1865 = vmatpush2.bf16.msra.mxu0 0
  %1866 = vmatprep.subr.bf16.mxu0 0
  %1867 = vmatpush2.bf16.msra.mxu0 0
  %1868 = vmatprep.subr.bf16.mxu0 0
  %1869 = vmatpush2.bf16.msra.mxu0 0
  %1870 = vmatprep.subr.bf16.mxu0 0
  %1871 = vmatpush2.bf16.msra.mxu0 0
  %1872 = vmatprep.subr.bf16.mxu0 0
  %1873 = vmatpush2.bf16.msra.mxu0 0
  %1874 = vmatprep.subr.bf16.mxu0 0
  %1875 = vmatpush2.bf16.msra.mxu0 0
  %1876 = vmatprep.subr.bf16.mxu0 0
  %1877 = vmatpush2.bf16.msra.mxu0 0
  %1878 = vmatprep.mubr.bf16.mxu0 0
  %1879 = vmatmul.mubr.bf16.gmra.mxu0 %v1781
  %v1880 = vpop.f32.mrf.mxu0
  %v1881 = vadd.f32 0.0, %v1880
  %v1882 = vpop.f32.mrf.mxu0
  %v1883 = vpop.f32.mrf.mxu0
  %v1884 = vpop.f32.mrf.mxu0
  %1885 = vdwg.mxu0
  %v1886 = vadd.f32 %v1665, %v1881
  %s1887 = scalar_lea.vmem %s0, 224
  %v1888 = vld [vmem:[%s1887] sm:$0xff]
  %v1889 = vld [vmem:[%s1887 + $0x8] sm:$0xff]
  %v1890 = vld [vmem:[%s1887 + $0x10] sm:$0xff]
  %v1891 = vld [vmem:[%s1887 + $0x18] sm:$0xff]
  %1892 = vmatprep.subr.bf16.mxu0 %v310
  %1893 = vmatpush1.bf16.msra.mxu0 %v309
  %1894 = vmatprep.subr.bf16.mxu0 %v306
  %1895 = vmatpush1.bf16.msra.mxu0 %v305
  %1896 = vmatprep.subr.bf16.mxu0 %v302
  %1897 = vmatpush1.bf16.msra.mxu0 %v301
  %1898 = vmatprep.subr.bf16.mxu0 %v298
  %1899 = vmatpush1.bf16.msra.mxu0 %v297
  %1900 = vmatprep.subr.bf16.mxu0 %v294
  %1901 = vmatpush1.bf16.msra.mxu0 %v293
  %1902 = vmatprep.subr.bf16.mxu0 %v290
  %1903 = vmatpush1.bf16.msra.mxu0 %v289
  %1904 = vmatprep.subr.bf16.mxu0 %v286
  %1905 = vmatpush1.bf16.msra.mxu0 %v285
  %1906 = vmatprep.subr.bf16.mxu0 %v282
  %1907 = vmatpush1.bf16.msra.mxu0 %v281
  %1908 = vmatprep.subr.bf16.mxu0 0
  %1909 = vmatpush2.bf16.msra.mxu0 0
  %1910 = vmatprep.subr.bf16.mxu0 0
  %1911 = vmatpush2.bf16.msra.mxu0 0
  %1912 = vmatprep.subr.bf16.mxu0 0
  %1913 = vmatpush2.bf16.msra.mxu0 0
  %1914 = vmatprep.subr.bf16.mxu0 0
  %1915 = vmatpush2.bf16.msra.mxu0 0
  %1916 = vmatprep.subr.bf16.mxu0 0
  %1917 = vmatpush2.bf16.msra.mxu0 0
  %1918 = vmatprep.subr.bf16.mxu0 0
  %1919 = vmatpush2.bf16.msra.mxu0 0
  %1920 = vmatprep.subr.bf16.mxu0 0
  %1921 = vmatpush2.bf16.msra.mxu0 0
  %1922 = vmatprep.subr.bf16.mxu0 0
  %1923 = vmatpush2.bf16.msra.mxu0 0
  %1924 = vmatprep.mubr.bf16.mxu0 0
  %1925 = vmatmul.mubr.bf16.gmra.mxu0 %v1781
  %v1926 = vpop.f32.mrf.mxu0
  %v1927 = vadd.f32 0.0, %v1926
  %v1928 = vpop.f32.mrf.mxu0
  %v1929 = vadd.f32 0.0, %v1928
  %v1930 = vpop.f32.mrf.mxu0
  %v1931 = vpop.f32.mrf.mxu0
  %1932 = vdwg.mxu0
  %1933 = vmatprep.subr.bf16.mxu0 %v312
  %1934 = vmatpush1.bf16.msra.mxu0 %v311
  %1935 = vmatprep.subr.bf16.mxu0 %v308
  %1936 = vmatpush1.bf16.msra.mxu0 %v307
  %1937 = vmatprep.subr.bf16.mxu0 %v304
  %1938 = vmatpush1.bf16.msra.mxu0 %v303
  %1939 = vmatprep.subr.bf16.mxu0 %v300
  %1940 = vmatpush1.bf16.msra.mxu0 %v299
  %1941 = vmatprep.subr.bf16.mxu0 %v296
  %1942 = vmatpush1.bf16.msra.mxu0 %v295
  %1943 = vmatprep.subr.bf16.mxu0 %v292
  %1944 = vmatpush1.bf16.msra.mxu0 %v291
  %1945 = vmatprep.subr.bf16.mxu0 %v288
  %1946 = vmatpush1.bf16.msra.mxu0 %v287
  %1947 = vmatprep.subr.bf16.mxu0 %v284
  %1948 = vmatpush1.bf16.msra.mxu0 %v283
  %1949 = vmatprep.subr.bf16.mxu0 0
  %1950 = vmatpush2.bf16.msra.mxu0 0
  %1951 = vmatprep.subr.bf16.mxu0 0
  %1952 = vmatpush2.bf16.msra.mxu0 0
  %1953 = vmatprep.subr.bf16.mxu0 0
  %1954 = vmatpush2.bf16.msra.mxu0 0
  %1955 = vmatprep.subr.bf16.mxu0 0
  %1956 = vmatpush2.bf16.msra.mxu0 0
  %1957 = vmatprep.subr.bf16.mxu0 0
  %1958 = vmatpush2.bf16.msra.mxu0 0
  %1959 = vmatprep.subr.bf16.mxu0 0
  %1960 = vmatpush2.bf16.msra.mxu0 0
  %1961 = vmatprep.subr.bf16.mxu0 0
  %1962 = vmatpush2.bf16.msra.mxu0 0
  %1963 = vmatprep.subr.bf16.mxu0 0
  %1964 = vmatpush2.bf16.msra.mxu0 0
  %1965 = vmatprep.mubr.bf16.mxu0 0
  %1966 = vmatmul.mubr.bf16.gmra.mxu0 %v1781
  %v1967 = vpop.f32.mrf.mxu0
  %v1968 = vadd.f32 0.0, %v1967
  %v1969 = vpop.f32.mrf.mxu0
  %v1970 = vadd.f32 0.0, %v1969
  %v1971 = vpop.f32.mrf.mxu0
  %v1972 = vpop.f32.mrf.mxu0
  %1973 = vdwg.mxu0
  %v1974 = vadd.f32 %v1888, %v1927
  %v1975 = vadd.f32 %v1889, %v1929
  %v1976 = vadd.f32 %v1890, %v1968
  %v1977 = vadd.f32 %v1891, %v1970
  %v1978 = vxor.u32 %v1974, 2147483648
  %v1979 = vmul.f32 %v1978, 1.442695
  %v1980 = vpow.pop %v1979
  %v1981 = vadd.f32 %v1980, 1.0
  %v1982 = vrcp.pop %v1981
  %v1983 = vmul.f32 1.0, %v1982
  %v1984 = vxor.u32 %v1975, 2147483648
  %v1985 = vmul.f32 %v1984, 1.442695
  %v1986 = vpow.pop %v1985
  %v1987 = vadd.f32 %v1986, 1.0
  %v1988 = vrcp.pop %v1987
  %v1989 = vmul.f32 1.0, %v1988
  %v1990 = vtanh.pop %v1976
  %v1991 = vxor.u32 %v1977, 2147483648
  %v1992 = vmul.f32 %v1991, 1.442695
  %v1993 = vpow.pop %v1992
  %v1994 = vadd.f32 %v1993, 1.0
  %v1995 = vrcp.pop %v1994
  %v1996 = vmul.f32 1.0, %v1995
  %v1997 = vmul.f32 %v1989, %v1778
  %v1998 = vmul.f32 %v1983, %v1990
  %v1999 = vadd.f32 %v1997, %v1998
  %v2000 = vtanh.pop %v1999
  %v2001 = vmul.f32 %v1996, %v2000
  %v2002 = vpack.c.bf16 %v2001, %v2001
  %v2003 = vld [vmem:[%s4 + $0x1c0] sm:$0xf]
  %v2004 = vld [vmem:[%s4 + $0x1c4] sm:$0xf]
  %v2005 = vld [vmem:[%s4 + $0x1c8] sm:$0xf]
  %v2006 = vld [vmem:[%s4 + $0x1cc] sm:$0xf]
  %v2007 = vld [vmem:[%s4 + $0x1d0] sm:$0xf]
  %v2008 = vld [vmem:[%s4 + $0x1d4] sm:$0xf]
  %v2009 = vld [vmem:[%s4 + $0x1d8] sm:$0xf]
  %v2010 = vld [vmem:[%s4 + $0x1dc] sm:$0xf]
  %v2011 = vld [vmem:[%s4 + $0x1e0] sm:$0xf]
  %v2012 = vld [vmem:[%s4 + $0x1e4] sm:$0xf]
  %v2013 = vld [vmem:[%s4 + $0x1e8] sm:$0xf]
  %v2014 = vld [vmem:[%s4 + $0x1ec] sm:$0xf]
  %v2015 = vld [vmem:[%s4 + $0x1f0] sm:$0xf]
  %v2016 = vld [vmem:[%s4 + $0x1f4] sm:$0xf]
  %v2017 = vld [vmem:[%s4 + $0x1f8] sm:$0xf]
  %v2018 = vld [vmem:[%s4 + $0x1fc] sm:$0xf]
  %v2035 = vunpack.c.l.b16 %v2003
  %v2036 = vunpack.c.l.b16 %v2004
  %v2037 = vunpack.c.l.b16 %v2005
  %v2038 = vunpack.c.l.b16 %v2006
  %v2039 = vunpack.c.l.b16 %v2007
  %v2040 = vunpack.c.l.b16 %v2008
  %v2041 = vunpack.c.l.b16 %v2009
  %v2042 = vunpack.c.l.b16 %v2010
  %v2043 = vunpack.c.l.b16 %v2011
  %v2044 = vunpack.c.l.b16 %v2012
  %v2045 = vunpack.c.l.b16 %v2013
  %v2046 = vunpack.c.l.b16 %v2014
  %v2047 = vunpack.c.l.b16 %v2015
  %v2048 = vunpack.c.l.b16 %v2016
  %v2049 = vunpack.c.l.b16 %v2017
  %v2050 = vunpack.c.l.b16 %v2018
  %v2051 = vpack.c.b16 %v2036, %v2035
  %v2052 = vpack.c.b16 %v2038, %v2037
  %v2053 = vpack.c.b16 %v2040, %v2039
  %v2054 = vpack.c.b16 %v2042, %v2041
  %v2055 = vpack.c.b16 %v2044, %v2043
  %v2056 = vpack.c.b16 %v2046, %v2045
  %v2057 = vpack.c.b16 %v2048, %v2047
  %v2058 = vpack.c.b16 %v2050, %v2049
  %2067 = vmatprep.subr.bf16.mxu0 0
  %2068 = vmatpush1.bf16.msra.mxu0 %v2058
  %2069 = vmatprep.subr.bf16.mxu0 0
  %2070 = vmatpush1.bf16.msra.mxu0 %v2057
  %2071 = vmatprep.subr.bf16.mxu0 0
  %2072 = vmatpush1.bf16.msra.mxu0 %v2056
  %2073 = vmatprep.subr.bf16.mxu0 0
  %2074 = vmatpush1.bf16.msra.mxu0 %v2055
  %2075 = vmatprep.subr.bf16.mxu0 0
  %2076 = vmatpush1.bf16.msra.mxu0 %v2054
  %2077 = vmatprep.subr.bf16.mxu0 0
  %2078 = vmatpush1.bf16.msra.mxu0 %v2053
  %2079 = vmatprep.subr.bf16.mxu0 0
  %2080 = vmatpush1.bf16.msra.mxu0 %v2052
  %2081 = vmatprep.subr.bf16.mxu0 0
  %2082 = vmatpush1.bf16.msra.mxu0 %v2051
  %2083 = vmatprep.subr.bf16.mxu0 0
  %2084 = vmatpush2.bf16.msra.mxu0 0
  %2085 = vmatprep.subr.bf16.mxu0 0
  %2086 = vmatpush2.bf16.msra.mxu0 0
  %2087 = vmatprep.subr.bf16.mxu0 0
  %2088 = vmatpush2.bf16.msra.mxu0 0
  %2089 = vmatprep.subr.bf16.mxu0 0
  %2090 = vmatpush2.bf16.msra.mxu0 0
  %2091 = vmatprep.subr.bf16.mxu0 0
  %2092 = vmatpush2.bf16.msra.mxu0 0
  %2093 = vmatprep.subr.bf16.mxu0 0
  %2094 = vmatpush2.bf16.msra.mxu0 0
  %2095 = vmatprep.subr.bf16.mxu0 0
  %2096 = vmatpush2.bf16.msra.mxu0 0
  %2097 = vmatprep.subr.bf16.mxu0 0
  %2098 = vmatpush2.bf16.msra.mxu0 0
  %2099 = vmatprep.mubr.bf16.mxu0 0
  %2100 = vmatmul.mubr.bf16.gmra.mxu0 %v2002
  %v2101 = vpop.f32.mrf.mxu0
  %v2102 = vadd.f32 0.0, %v2101
  %v2103 = vpop.f32.mrf.mxu0
  %v2104 = vpop.f32.mrf.mxu0
  %v2105 = vpop.f32.mrf.mxu0
  %2106 = vdwg.mxu0
  %v2107 = vadd.f32 %v1886, %v2102
  %2108 = vst [vmem:[%s7] sm:$0xff] %v2107
  // Predicated region
  $region30: #{model_forward.1} parent=0 // pred_check
    _
  $region31: #{model_forward.1} parent=0 // pred_check_branch
    %2110 = sbr.rel (0) target = $region33
  $region32: #{model_forward.1} parent=0 // pred_region
    _
  $region33: #{model_forward.1} parent=0 // pred_fallthru
    _
  // Predicated region
  $region34: #{model_forward.1} parent=0 // pred_check
    _
  $region35: #{model_forward.1} parent=0 // pred_check_branch
    %2112 = sbr.rel (0) target = $region37
  $region36: #{model_forward.1} parent=0 // pred_region
    _
  $region37: #{model_forward.1} parent=0 // pred_fallthru
    _

</llo_original>
